<compile_context>
chip_gen: v6e
topology: v6e:2x2x1
jax: 0.10.0
libtpu: 0.0.40
codegen_flags: <defaults>
</compile_context>

<pallas_src>
import jax
import jax.numpy as jnp
from jax.experimental import pallas as pl
from jax.experimental.pallas import tpu as pltpu


def _fusion_kernel(x_ref, w1_ref, b1_ref, w2_ref, b2_ref, wp_ref, bp_ref, o_ref):
    # x block: (BB, L, Q, D) float32
    x = x_ref[...]
    BB, L, Q, D = x.shape
    T = L * Q
    O = wp_ref.shape[1]

    # ---- adaptive gating: one batched MLP over all BB*L layer rows.
    #      The wrapper folded 1/Q into w1, so a plain sum over queries == mean.
    gsum = jnp.sum(x, axis=2)                                    # (BB, L, D)
    g2 = gsum.reshape(BB * L, D)                                 # (BB*L, D)
    h = jnp.dot(g2, w1_ref[...],
                preferred_element_type=jnp.float32) + b1_ref[...]   # (BB*L, D//4)
    h = jnp.maximum(h, 0.0)                                      # ReLU
    # width-1 second layer as a VPU multiply + lane reduce (no 1-column MXU matmul)
    logit = jnp.sum(h * w2_ref[...], axis=-1, keepdims=True) + b2_ref[0, 0]
    w = jax.nn.sigmoid(logit)                                    # (BB*L, 1)

    # ---- weight each layer's queries; concat along the query axis (pure regroup)
    xw = x.reshape(BB * L, Q, D) * w[:, :, None]                 # (BB*L, Q, D)
    xcat = xw.reshape(BB, T, D)                                  # (BB, T, D), layer-major

    # ---- final_proj over the query axis, a single unbatched contraction:
    #      z[b, d, o] = sum_t xcat[b, t, d] * Wp[t, o]  -> natively (d, o) order
    z = jax.lax.dot_general(
        xcat, wp_ref[...],
        dimension_numbers=(((1,), (0,)), ((), ())),
        preferred_element_type=jnp.float32)                      # (BB, D, O)
    z = z + bp_ref[...]                                          # (1, O) bias, broadcast

    # ---- L2 normalize over the flattened D*O features (order-invariant reduce)
    ss = jnp.sum(z * z, axis=2, keepdims=True)                   # (BB, D, 1) lane reduce
    nrm2 = jnp.sum(ss, axis=1, keepdims=True)                    # (BB, 1, 1) sublane reduce
    inv = jax.lax.rsqrt(jnp.maximum(nrm2, 1e-24))                # == 1/max(||z||, 1e-12)
    o_ref[...] = (z * inv).reshape(BB, D * O)                    # lane-dense (BB, D*O) store


def _rup(v, m):
    return ((v + m - 1) // m) * m


def _tpu_vmem_capacity():
    try:
        cap = getattr(pltpu.get_tpu_info(), "vmem_capacity_bytes", None)
        if cap:
            return int(cap)
    except Exception:
        pass
    return 128 * 1024 * 1024          # v5e/v6e-class default if the query is unavailable


def _pick_block_b(B, L, Q, D, O, *, vmem_budget_bytes):
    """Largest batch block BB that (a) divides B, (b) fits a padding- and
    temporary-aware double-buffered VMEM budget, (c) keeps stores sublane-dense
    (BB % 8 == 0 when possible), and (d) leaves >= 2 grid steps, preferring an
    even count so both v7x TensorCores stay busy."""
    # Physically padded f32 bytes per batch row (last dim -> 128 lanes,
    # second-to-last -> 8 sublanes).
    x_row = L * _rup(Q, 8) * _rup(D, 128) * 4            # x input tile
    out_row = _rup(O * D, 128) * 4                        # output tile
    z_row = _rup(D, 8) * _rup(O, 128) * 4                 # (D, O) projection temp
    # 2x for double-buffered in/out blocks, plus one extra x block for xw/xcat.
    bytes_per_b = 2 * (x_row + out_row) + x_row + z_row
    cap = max(1, vmem_budget_bytes // bytes_per_b)
    cap = int(min(cap, B))
    if B > 1:
        cap = min(cap, max(1, B // 2))                    # always >= 2 grid steps
    divisors = [bb for bb in range(cap, 0, -1) if B % bb == 0]
    for bb in divisors:                                   # 8-aligned AND even step count
        if bb % 8 == 0 and (B // bb) % 2 == 0:
            return bb
    for bb in divisors:                                   # 8-aligned
        if bb % 8 == 0:
            return bb
    for bb in divisors:                                   # even step count
        if (B // bb) % 2 == 0:
            return bb
    return divisors[0] if divisors else 1


def cmqe_adaptive_fusion(x, params):
    """x: (B, L, Q, D) float32 stacked layer outputs. Returns (B, D*output_dim)
    in PyTorch's flatten(1) (d, o) order."""
    B, L, Q, D = x.shape
    Dq = params["w1"].shape[1]                            # feat_dim // 4
    T, O = params["wp"].shape                             # total_queries, output_dim
    assert T == L * Q

    vmem_cap = _tpu_vmem_capacity()
    budget = min(24 << 20, vmem_cap // 5)                 # ~24 MiB (v5e/v6e), ~12.8 MiB (v7x)
    vmem_limit = int(min(40 << 20, (vmem_cap * 5) // 8))  # <= 40 MiB, generation-aware
    BB = _pick_block_b(B, L, Q, D, O, vmem_budget_bytes=budget)

    w1s = params["w1"] * jnp.float32(1.0 / Q)             # fold the query-mean 1/Q into W1
    w2row = params["w2"].T                                # (1, Dq): second layer as a VPU reduce

    out = pl.pallas_call(
        _fusion_kernel,
        out_shape=jax.ShapeDtypeStruct((B, D * O), jnp.float32),
        grid=(B // BB,),
        in_specs=[
            pl.BlockSpec((BB, L, Q, D), lambda b: (b, 0, 0, 0)),   # x, blocked on batch
            pl.BlockSpec((D, Dq), lambda b: (0, 0)),               # w1 * (1/Q), pre-transposed
            pl.BlockSpec((1, Dq), lambda b: (0, 0)),               # b1
            pl.BlockSpec((1, Dq), lambda b: (0, 0)),               # w2 as a row
            pl.BlockSpec(memory_space=pltpu.MemorySpace.SMEM),     # b2 scalar in SMEM
            pl.BlockSpec((T, O), lambda b: (0, 0)),                # final_proj weight (T, O)
            pl.BlockSpec((1, O), lambda b: (0, 0)),                # final_proj bias (1, O)
        ],
        out_specs=pl.BlockSpec((BB, D * O), lambda b: (b, 0)),
        compiler_params=pltpu.CompilerParams(
            dimension_semantics=("parallel",),
            vmem_limit_bytes=vmem_limit),
    )(x, w1s, params["b1"], w2row, params["b2"], params["wp"], params["bp"])

    # Kernel stores rows already in PyTorch's flatten(1) (d, o) order.
    return out


def _reference(x, params):
    """Pure-JAX reference mirroring the PyTorch forward."""
    B, L, Q, D = x.shape
    weighted = []
    for l in range(L):
        out = x[:, l]                              # (B, Q, D)
        g = jnp.mean(out, axis=1)                  # (B, D)
        h = jax.nn.relu(g @ params["w1"] + params["b1"][0])
        w = jax.nn.sigmoid(h @ params["w2"] + params["b2"][0])   # (B, 1)
        weighted.append(out * w[:, None, :])
    cat = jnp.concatenate(weighted, axis=1)        # (B, T, D)
    y = jnp.einsum("btd,to->bdo", cat, params["wp"]) + params["bp"][0]
    y = y.reshape(B, -1)
    n = jnp.linalg.norm(y, axis=-1, keepdims=True)
    return y / jnp.maximum(n, 1e-12)


if __name__ == "__main__":
    # Small deterministic config: feat_dim=32, 2 layers x 8 queries = 16 total
    # queries, output_dim=8, batch=16 (kernel runs BB=8 over a 2-step grid).
    B, L, Q, D, O = 16, 2, 8, 32, 8
    Dq = D // 4
    T = L * Q

    key = jax.random.PRNGKey(0)
    ks = jax.random.split(key, 8)

    # layer_outputs (stacked): (B, L, Q, D)
    x = jax.random.normal(ks[0], (B, L, Q, D), dtype=jnp.float32)

    # Deterministic parameter init (MLP weights stored pre-transposed so the
    # kernel does x @ W; final_proj kept in its natural (T, O) layout).
    params = {
        "w1": 0.1 * jax.random.normal(ks[1], (D, Dq), dtype=jnp.float32),
        "b1": 0.1 * jax.random.normal(ks[2], (1, Dq), dtype=jnp.float32),
        "w2": 0.1 * jax.random.normal(ks[3], (Dq, 1), dtype=jnp.float32),
        "b2": 0.1 * jax.random.normal(ks[4], (1, 1), dtype=jnp.float32),
        "wp": 0.1 * jax.random.normal(ks[5], (T, O), dtype=jnp.float32),
        "bp": 0.1 * jax.random.normal(ks[6], (1, O), dtype=jnp.float32),
    }

    out = cmqe_adaptive_fusion(x, params)
    out = jax.block_until_ready(out)

    ref = _reference(x, params)
    assert out.shape == (B, D * O), out.shape
    assert jnp.allclose(out, ref, atol=1e-5, rtol=1e-5), (
        float(jnp.max(jnp.abs(out - ref))))

    print("KERNEL_OK")
</pallas_src>

<mosaic_0001>
module attributes {stable_mosaic.version = 11 : i64} {
  func.func @_fusion_kernel(%arg0: i32, %arg1: memref<8x2x8x32xf32, #tpu.memory_space<vmem>>, %arg2: memref<32x8xf32, #tpu.memory_space<vmem>>, %arg3: memref<1x8xf32, #tpu.memory_space<vmem>>, %arg4: memref<1x8xf32, #tpu.memory_space<vmem>>, %arg5: memref<1x1xf32, #tpu.memory_space<smem>>, %arg6: memref<16x8xf32, #tpu.memory_space<vmem>>, %arg7: memref<1x8xf32, #tpu.memory_space<vmem>>, %arg8: memref<8x256xf32, #tpu.memory_space<vmem>>) attributes {dimension_semantics = [#tpu.dimension_semantics<parallel>], iteration_bounds = array<i64: 2>, scalar_prefetch = 0 : i64, scratch_operands = 0 : i64, tpu.core_type = #tpu.core_type<tc>, window_params = [{transform_indices = @transform_0, window_bounds = array<i64: 8, 2, 8, 32>}, {pipeline_mode = #tpu.pipeline_mode<synchronous>, transform_indices = @transform_1, window_bounds = array<i64: 32, 8>}, {pipeline_mode = #tpu.pipeline_mode<synchronous>, transform_indices = @transform_2, window_bounds = array<i64: 1, 8>}, {pipeline_mode = #tpu.pipeline_mode<synchronous>, transform_indices = @transform_3, window_bounds = array<i64: 1, 8>}, {transform_indices = @transform_4, window_bounds = array<i64: 1, 1>}, {pipeline_mode = #tpu.pipeline_mode<synchronous>, transform_indices = @transform_5, window_bounds = array<i64: 16, 8>}, {pipeline_mode = #tpu.pipeline_mode<synchronous>, transform_indices = @transform_6, window_bounds = array<i64: 1, 8>}, {transform_indices = @transform_7, window_bounds = array<i64: 8, 256>}]} {
    %c0 = arith.constant 0 : index
    %c0_0 = arith.constant 0 : index
    %c0_1 = arith.constant 0 : index
    %c0_2 = arith.constant 0 : index
    %0 = vector.load %arg1[%c0, %c0_0, %c0_1, %c0_2] : memref<8x2x8x32xf32, #tpu.memory_space<vmem>>, vector<8x2x8x32xf32>
    %cst = arith.constant dense<0.000000e+00> : vector<8x2x32xf32>
    %1 = vector.multi_reduction <add>, %0, %cst [2] : vector<8x2x8x32xf32> to vector<8x2x32xf32>
    %2 = vector.shape_cast %1 : vector<8x2x32xf32> to vector<16x32xf32>
    %c0_3 = arith.constant 0 : index
    %c0_4 = arith.constant 0 : index
    %3 = vector.load %arg2[%c0_3, %c0_4] : memref<32x8xf32, #tpu.memory_space<vmem>>, vector<32x8xf32>
    %cst_5 = arith.constant dense<0.000000e+00> : vector<16x8xf32>
    %4 = tpu.matmul %2, %3, %cst_5 {dimension_numbers = #tpu.dot_dimension_numbers<[1], [0], [0], [1], [0, 0, 1, 1], [], []>} : vector<16x32xf32>, vector<32x8xf32>, vector<16x8xf32> -> vector<16x8xf32>
    %c0_6 = arith.constant 0 : index
    %c0_7 = arith.constant 0 : index
    %5 = vector.load %arg3[%c0_6, %c0_7] : memref<1x8xf32, #tpu.memory_space<vmem>>, vector<1x8xf32>
    %6 = vector.broadcast %5 : vector<1x8xf32> to vector<16x8xf32>
    %7 = arith.addf %4, %6 : vector<16x8xf32>
    %cst_8 = arith.constant 0.000000e+00 : f32
    %8 = vector.broadcast %cst_8 : f32 to vector<16x8xf32>
    %9 = arith.maximumf %7, %8 : vector<16x8xf32>
    %c0_9 = arith.constant 0 : index
    %c0_10 = arith.constant 0 : index
    %10 = vector.load %arg4[%c0_9, %c0_10] : memref<1x8xf32, #tpu.memory_space<vmem>>, vector<1x8xf32>
    %11 = vector.broadcast %10 : vector<1x8xf32> to vector<16x8xf32>
    %12 = arith.mulf %9, %11 : vector<16x8xf32>
    %cst_11 = arith.constant dense<0.000000e+00> : vector<16xf32>
    %13 = vector.multi_reduction <add>, %12, %cst_11 [1] : vector<16x8xf32> to vector<16xf32>
    %14 = vector.shape_cast %13 : vector<16xf32> to vector<16x1xf32>
    %c0_12 = arith.constant 0 : index
    %c0_13 = arith.constant 0 : index
    %15 = memref.load %arg5[%c0_12, %c0_13] : memref<1x1xf32, #tpu.memory_space<smem>>
    %16 = vector.broadcast %15 : f32 to vector<16x1xf32>
    %17 = arith.addf %14, %16 : vector<16x1xf32>
    %18 = arith.negf %17 : vector<16x1xf32>
    %19 = math.exp %18 : vector<16x1xf32>
    %cst_14 = arith.constant 1.000000e+00 : f32
    %20 = vector.broadcast %cst_14 : f32 to vector<16x1xf32>
    %21 = arith.addf %20, %19 : vector<16x1xf32>
    %22 = arith.divf %20, %21 : vector<16x1xf32>
    %23 = vector.shape_cast %0 : vector<8x2x8x32xf32> to vector<16x8x32xf32>
    %24 = vector.shape_cast %22 : vector<16x1xf32> to vector<16x1x1xf32>
    %25 = vector.broadcast %24 : vector<16x1x1xf32> to vector<16x8x32xf32>
    %26 = arith.mulf %23, %25 : vector<16x8x32xf32>
    %27 = vector.shape_cast %26 : vector<16x8x32xf32> to vector<8x16x32xf32>
    %c0_15 = arith.constant 0 : index
    %c0_16 = arith.constant 0 : index
    %28 = vector.load %arg6[%c0_15, %c0_16] : memref<16x8xf32, #tpu.memory_space<vmem>>, vector<16x8xf32>
    %cst_17 = arith.constant dense<0.000000e+00> : vector<8x32x8xf32>
    %29 = tpu.matmul %27, %28, %cst_17 {dimension_numbers = #tpu.dot_dimension_numbers<[1], [0], [0, 2], [1], [0, 0, 0, 2, 1, 1], [], []>} : vector<8x16x32xf32>, vector<16x8xf32>, vector<8x32x8xf32> -> vector<8x32x8xf32>
    %c0_18 = arith.constant 0 : index
    %c0_19 = arith.constant 0 : index
    %30 = vector.load %arg7[%c0_18, %c0_19] : memref<1x8xf32, #tpu.memory_space<vmem>>, vector<1x8xf32>
    %31 = vector.shape_cast %30 : vector<1x8xf32> to vector<1x1x8xf32>
    %32 = vector.broadcast %31 : vector<1x1x8xf32> to vector<8x32x8xf32>
    %33 = arith.addf %29, %32 : vector<8x32x8xf32>
    %34 = arith.mulf %33, %33 : vector<8x32x8xf32>
    %cst_20 = arith.constant dense<0.000000e+00> : vector<8x32xf32>
    %35 = vector.multi_reduction <add>, %34, %cst_20 [2] : vector<8x32x8xf32> to vector<8x32xf32>
    %36 = vector.shape_cast %35 : vector<8x32xf32> to vector<8x32x1xf32>
    %cst_21 = arith.constant dense<0.000000e+00> : vector<8x1xf32>
    %37 = vector.multi_reduction <add>, %36, %cst_21 [1] : vector<8x32x1xf32> to vector<8x1xf32>
    %38 = vector.shape_cast %37 : vector<8x1xf32> to vector<8x1x1xf32>
    %cst_22 = arith.constant 1.000000e-24 : f32
    %39 = vector.broadcast %cst_22 : f32 to vector<8x1x1xf32>
    %40 = arith.maximumf %38, %39 : vector<8x1x1xf32>
    %41 = math.rsqrt %40 : vector<8x1x1xf32>
    %42 = vector.broadcast %41 : vector<8x1x1xf32> to vector<8x32x8xf32>
    %43 = arith.mulf %33, %42 : vector<8x32x8xf32>
    %44 = vector.shape_cast %43 : vector<8x32x8xf32> to vector<8x256xf32>
    %c0_23 = arith.constant 0 : index
    %c0_24 = arith.constant 0 : index
    %45 = vector.load %arg8[%c0_23, %c0_24] : memref<8x256xf32, #tpu.memory_space<vmem>>, vector<8x256xf32>
    tpu.vector_store %arg8[%c0_23, %c0_24], %44 {strides = array<i32>} : memref<8x256xf32, #tpu.memory_space<vmem>>, vector<8x256xf32>,
    return
  }
  func.func @transform_0(%arg0: i32) -> (i32, i32, i32, i32) {
    %c0_i32 = arith.constant 0 : i32
    %c0_i32_0 = arith.constant 0 : i32
    %c0_i32_1 = arith.constant 0 : i32
    %c0_i32_2 = arith.constant 0 : i32
    return %arg0, %c0_i32, %c0_i32_0, %c0_i32_1 : i32, i32, i32, i32
  }
  func.func @transform_1(%arg0: i32) -> (i32, i32) {
    %c0_i32 = arith.constant 0 : i32
    %c0_i32_0 = arith.constant 0 : i32
    %c0_i32_1 = arith.constant 0 : i32
    return %c0_i32, %c0_i32_0 : i32, i32
  }
  func.func @transform_2(%arg0: i32) -> (i32, i32) {
    %c0_i32 = arith.constant 0 : i32
    %c0_i32_0 = arith.constant 0 : i32
    %c0_i32_1 = arith.constant 0 : i32
    return %c0_i32, %c0_i32_0 : i32, i32
  }
  func.func @transform_3(%arg0: i32) -> (i32, i32) {
    %c0_i32 = arith.constant 0 : i32
    %c0_i32_0 = arith.constant 0 : i32
    %c0_i32_1 = arith.constant 0 : i32
    return %c0_i32, %c0_i32_0 : i32, i32
  }
  func.func @transform_4(%arg0: i32) -> (i32, i32) {
    %c0_i32 = arith.constant 0 : i32
    %c0_i32_0 = arith.constant 0 : i32
    %c0_i32_1 = arith.constant 0 : i32
    return %c0_i32, %c0_i32_0 : i32, i32
  }
  func.func @transform_5(%arg0: i32) -> (i32, i32) {
    %c0_i32 = arith.constant 0 : i32
    %c0_i32_0 = arith.constant 0 : i32
    %c0_i32_1 = arith.constant 0 : i32
    return %c0_i32, %c0_i32_0 : i32, i32
  }
  func.func @transform_6(%arg0: i32) -> (i32, i32) {
    %c0_i32 = arith.constant 0 : i32
    %c0_i32_0 = arith.constant 0 : i32
    %c0_i32_1 = arith.constant 0 : i32
    return %c0_i32, %c0_i32_0 : i32, i32
  }
  func.func @transform_7(%arg0: i32) -> (i32, i32) {
    %c0_i32 = arith.constant 0 : i32
    %c0_i32_0 = arith.constant 0 : i32
    return %arg0, %c0_i32 : i32, i32
  }
}

</mosaic_0001>

<llo_original>
// kernel: tpu_custom_call.1
$region0: #{tpu_custom_call.1}
  #allocation0 [shape = 'u32[]', space=smem, size = 0x4, offset = 0x4, fixed_abs, tag = 'smem constant byte address 0x4 - core index']
  #allocation1 [shape = 'u32[144,128]{1,0:T(1,128)}', space=vmem, size = 0x12000, scoped, tag = 'internal scratch']
  #allocation2 [shape = 'f32[1,1]{1,0:T(1,128)S(6)}', space=smem, size = 0x200, scoped, tag = 'scoped memory for tpu_custom_call.1']
  %s0 = inlined_call_operand.hbm [shape: f32[16,2,8,32], index: 0, kind: input, shape index: {}]
  %s1 = inlined_call_operand.vmem [shape: f32[32,8], index: 1, kind: input, shape index: {}]
  %s2 = inlined_call_operand.vmem [shape: f32[1,8], index: 2, kind: input, shape index: {}]
  %s3 = inlined_call_operand.vmem [shape: f32[1,8], index: 3, kind: input, shape index: {}]
  %s4 = inlined_call_operand.<no memory space> [shape: f32[1,1], index: 4, kind: input, shape index: {}]
  %s5 = inlined_call_operand.vmem [shape: f32[16,8], index: 5, kind: input, shape index: {}]
  %s6 = inlined_call_operand.vmem [shape: f32[1,8], index: 6, kind: input, shape index: {}]
  %s7 = inlined_call_operand.hbm [shape: f32[16,256], index: 7, kind: output, shape index: {}]
  %s8 = sld [smem:[#allocation0]]
  $region65: #{tpu_custom_call.1} parent=0
    _
  %s10 = ssub.s32 1, %s8
  %s11 = scalar_select 0, %s10, %s8
  %12 = sst [smem:[#allocation2]] %s4
  $region1: #{tpu_custom_call.1} parent=0
    #allocation3 [shape = 'u8[131072]{0}', space=vmem, size = 0x20000, scoped, tag = 'input window, operand 0']
    #allocation4 [shape = 's32[2]{0}', space=sflag, size = 0x8, scoped, tag = 'scoped memory for tpu_custom_call.1']
    #allocation5 [shape = 's32[2]{0}', space=sflag, size = 0x8, scoped, tag = 'scoped memory for tpu_custom_call.1']
    #allocation6 [shape = 'u8[16384]{0}', space=vmem, size = 0x4000, scoped, tag = 'output window, operand 0']
    %13 = vsyncpa [#allocation4], 0
    %s14 = scalar_lea.sflag [#allocation4], 1
    %15 = vsyncpa %s14, 0
    %16 = vsyncpa [#allocation5], 0
    %s17 = scalar_lea.sflag [#allocation5], 1
    %18 = vsyncpa %s17, 0
    loop: start=0, step=1, limit=4
    $region2: #{tpu_custom_call.1} parent=1 // loop_pre_header
      _
    $region3: #{tpu_custom_call.1} parent=1 // loop_header
      %s20 = sphi 0, %s24
      %p21 = scmp.ge.s32.totalorder %s20, 4
      %s30 = sphi 0, %s32
      %s33 = sphi 0, %s30
      %s34 = sphi 0, %s33
      %s50 = sphi 0, %s34
      %s54 = sphi 0, %s54
      %s56 = sphi 0, %s54
      %s57 = sphi 0, %s56
      %s71 = sphi 0, %s57
      %s75 = sphi 0, %s75
      %s77 = sphi 0, %s75
      %s78 = sphi 0, %s77
      %s92 = sphi 0, %s78
      %s96 = sphi 0, %s96
      %s98 = sphi 0, %s96
      %s99 = sphi 0, %s98
      %s113 = sphi 0, %s99
      %s117 = sphi 0, %s117
      %s119 = sphi 0, %s117
      %s120 = sphi 0, %s119
      %s134 = sphi 0, %s120
      %s138 = sphi 0, %s138
      %s140 = sphi 0, %s138
      %s141 = sphi 0, %s140
      %s155 = sphi 0, %s141
      %s159 = sphi 0, %s159
      %s161 = sphi 0, %s159
      %s162 = sphi 0, %s161
      %s176 = sphi 0, %s162
      %s182 = sphi 0, %s184
      %s185 = sphi 0, %s182
      %s186 = sphi 0, %s185
      %s202 = sphi 0, %s186
    $region4: #{tpu_custom_call.1} parent=1 // loop_header_branch
      %23 = sbr.rel (%p21) target = $region8
    $region5: #{tpu_custom_call.1} parent=1 // loop_body
      %s25 = ssub.s32 %s20, 1
      %s26 = ssub.s32 %s20, 2
      %s27 = sadd.s32 %s20, 1
      %s28 = ssub.s32 %s20, %s27
      %p29 = scmp.eq.s32.totalorder %s28, 0
      %s31 = sadd.s32 %s30, 1
      %s32 = scalar_select %p29, %s30, %s31
      %p35 = pneg %p29
      %p36 = scmp.eq.s32.totalorder %s20, 1
      %p37 = por %p35, %p36
      %p38 = scmp.ne.s32.totalorder %s30, %s33
      %p39 = scmp.eq.s32.totalorder %s20, 0
      %p40 = por %p38, %p39
      %p41 = scmp.ne.s32.totalorder %s30, %s33
      %p42 = scmp.eq.s32.totalorder %s25, 1
      %p43 = por %p41, %p42
      %p44 = scmp.ne.s32.totalorder %s33, %s34
      %p45 = scmp.eq.s32.totalorder %s25, 0
      %p46 = por %p44, %p45
      %p47 = scmp.ne.s32.totalorder %s33, %s34
      %p48 = scmp.eq.s32.totalorder %s26, 1
      %p49 = por %p47, %p48
      %p51 = scmp.ne.s32.totalorder %s34, %s50
      %p52 = scmp.eq.s32.totalorder %s26, 0
      %p53 = por %p51, %p52
      %s55 = sadd.s32 %s54, 1
      %p58 = scmp.eq.s32.totalorder %s20, 1
      %p59 = scmp.ne.s32.totalorder %s54, %s56
      %p60 = scmp.eq.s32.totalorder %s20, 0
      %p61 = por %p59, %p60
      %p62 = scmp.ne.s32.totalorder %s54, %s56
      %p63 = scmp.eq.s32.totalorder %s25, 1
      %p64 = por %p62, %p63
      %p65 = scmp.ne.s32.totalorder %s56, %s57
      %p66 = scmp.eq.s32.totalorder %s25, 0
      %p67 = por %p65, %p66
      %p68 = scmp.ne.s32.totalorder %s56, %s57
      %p69 = scmp.eq.s32.totalorder %s26, 1
      %p70 = por %p68, %p69
      %p72 = scmp.ne.s32.totalorder %s57, %s71
      %p73 = scmp.eq.s32.totalorder %s26, 0
      %p74 = por %p72, %p73
      %s76 = sadd.s32 %s75, 1
      %p79 = scmp.eq.s32.totalorder %s20, 1
      %p80 = scmp.ne.s32.totalorder %s75, %s77
      %p81 = scmp.eq.s32.totalorder %s20, 0
      %p82 = por %p80, %p81
      %p83 = scmp.ne.s32.totalorder %s75, %s77
      %p84 = scmp.eq.s32.totalorder %s25, 1
      %p85 = por %p83, %p84
      %p86 = scmp.ne.s32.totalorder %s77, %s78
      %p87 = scmp.eq.s32.totalorder %s25, 0
      %p88 = por %p86, %p87
      %p89 = scmp.ne.s32.totalorder %s77, %s78
      %p90 = scmp.eq.s32.totalorder %s26, 1
      %p91 = por %p89, %p90
      %p93 = scmp.ne.s32.totalorder %s78, %s92
      %p94 = scmp.eq.s32.totalorder %s26, 0
      %p95 = por %p93, %p94
      %s97 = sadd.s32 %s96, 1
      %p100 = scmp.eq.s32.totalorder %s20, 1
      %p101 = scmp.ne.s32.totalorder %s96, %s98
      %p102 = scmp.eq.s32.totalorder %s20, 0
      %p103 = por %p101, %p102
      %p104 = scmp.ne.s32.totalorder %s96, %s98
      %p105 = scmp.eq.s32.totalorder %s25, 1
      %p106 = por %p104, %p105
      %p107 = scmp.ne.s32.totalorder %s98, %s99
      %p108 = scmp.eq.s32.totalorder %s25, 0
      %p109 = por %p107, %p108
      %p110 = scmp.ne.s32.totalorder %s98, %s99
      %p111 = scmp.eq.s32.totalorder %s26, 1
      %p112 = por %p110, %p111
      %p114 = scmp.ne.s32.totalorder %s99, %s113
      %p115 = scmp.eq.s32.totalorder %s26, 0
      %p116 = por %p114, %p115
      %s118 = sadd.s32 %s117, 1
      %p121 = scmp.eq.s32.totalorder %s20, 1
      %p122 = scmp.ne.s32.totalorder %s117, %s119
      %p123 = scmp.eq.s32.totalorder %s20, 0
      %p124 = por %p122, %p123
      %p125 = scmp.ne.s32.totalorder %s117, %s119
      %p126 = scmp.eq.s32.totalorder %s25, 1
      %p127 = por %p125, %p126
      %p128 = scmp.ne.s32.totalorder %s119, %s120
      %p129 = scmp.eq.s32.totalorder %s25, 0
      %p130 = por %p128, %p129
      %p131 = scmp.ne.s32.totalorder %s119, %s120
      %p132 = scmp.eq.s32.totalorder %s26, 1
      %p133 = por %p131, %p132
      %p135 = scmp.ne.s32.totalorder %s120, %s134
      %p136 = scmp.eq.s32.totalorder %s26, 0
      %p137 = por %p135, %p136
      %s139 = sadd.s32 %s138, 1
      %p142 = scmp.eq.s32.totalorder %s20, 1
      %p143 = scmp.ne.s32.totalorder %s138, %s140
      %p144 = scmp.eq.s32.totalorder %s20, 0
      %p145 = por %p143, %p144
      %p146 = scmp.ne.s32.totalorder %s138, %s140
      %p147 = scmp.eq.s32.totalorder %s25, 1
      %p148 = por %p146, %p147
      %p149 = scmp.ne.s32.totalorder %s140, %s141
      %p150 = scmp.eq.s32.totalorder %s25, 0
      %p151 = por %p149, %p150
      %p152 = scmp.ne.s32.totalorder %s140, %s141
      %p153 = scmp.eq.s32.totalorder %s26, 1
      %p154 = por %p152, %p153
      %p156 = scmp.ne.s32.totalorder %s141, %s155
      %p157 = scmp.eq.s32.totalorder %s26, 0
      %p158 = por %p156, %p157
      %s160 = sadd.s32 %s159, 1
      %p163 = scmp.eq.s32.totalorder %s20, 1
      %p164 = scmp.ne.s32.totalorder %s159, %s161
      %p165 = scmp.eq.s32.totalorder %s20, 0
      %p166 = por %p164, %p165
      %p167 = scmp.ne.s32.totalorder %s159, %s161
      %p168 = scmp.eq.s32.totalorder %s25, 1
      %p169 = por %p167, %p168
      %p170 = scmp.ne.s32.totalorder %s161, %s162
      %p171 = scmp.eq.s32.totalorder %s25, 0
      %p172 = por %p170, %p171
      %p173 = scmp.ne.s32.totalorder %s161, %s162
      %p174 = scmp.eq.s32.totalorder %s26, 1
      %p175 = por %p173, %p174
      %p177 = scmp.ne.s32.totalorder %s162, %s176
      %p178 = scmp.eq.s32.totalorder %s26, 0
      %p179 = por %p177, %p178
      %s180 = ssub.s32 %s20, %s27
      %p181 = scmp.eq.s32.totalorder %s180, 0
      %s183 = sadd.s32 %s182, 1
      %s184 = scalar_select %p181, %s182, %s183
      %p187 = pneg %p181
      %p188 = scmp.eq.s32.totalorder %s20, 1
      %p189 = por %p187, %p188
      %p190 = scmp.ne.s32.totalorder %s182, %s185
      %p191 = scmp.eq.s32.totalorder %s20, 0
      %p192 = por %p190, %p191
      %p193 = scmp.ne.s32.totalorder %s182, %s185
      %p194 = scmp.eq.s32.totalorder %s25, 1
      %p195 = por %p193, %p194
      %p196 = scmp.ne.s32.totalorder %s185, %s186
      %p197 = scmp.eq.s32.totalorder %s25, 0
      %p198 = por %p196, %p197
      %p199 = scmp.ne.s32.totalorder %s185, %s186
      %p200 = scmp.eq.s32.totalorder %s26, 1
      %p201 = por %p199, %p200
      %p203 = scmp.ne.s32.totalorder %s186, %s202
      %p204 = scmp.eq.s32.totalorder %s26, 0
      %p205 = por %p203, %p204
      %p206 = scmp.le.s32.totalorder 1, %s20
      %p207 = scmp.lt.s32.totalorder %s20, 3
      %p208 = pnand %p206, %p207
      %p209 = pneg %p208
      // Predicated region
      $region9: #{tpu_custom_call.1} parent=5 // pred_check
        _
      $region10: #{tpu_custom_call.1} parent=5 // pred_check_branch
        %211 = sbr.rel (%p208) target = $region12
      $region11: #{tpu_custom_call.1} parent=5 // pred_region
        %s212 = ssub.s32 %s20, 1
        // Predicated region
        $region13: #{tpu_custom_call.1} parent=11 // pred_check
          %p213 = pneg %p67
        $region14: #{tpu_custom_call.1} parent=11 // pred_check_branch
          %215 = sbr.rel (%p213) target = $region16
        $region15: #{tpu_custom_call.1} parent=11 // pred_region
          _
        $region16: #{tpu_custom_call.1} parent=11 // pred_fallthru
          _
        // Predicated region
        $region17: #{tpu_custom_call.1} parent=11 // pred_check
          %p216 = pneg %p88
        $region18: #{tpu_custom_call.1} parent=11 // pred_check_branch
          %218 = sbr.rel (%p216) target = $region20
        $region19: #{tpu_custom_call.1} parent=11 // pred_region
          _
        $region20: #{tpu_custom_call.1} parent=11 // pred_fallthru
          _
        // Predicated region
        $region21: #{tpu_custom_call.1} parent=11 // pred_check
          %p219 = pneg %p109
        $region22: #{tpu_custom_call.1} parent=11 // pred_check_branch
          %221 = sbr.rel (%p219) target = $region24
        $region23: #{tpu_custom_call.1} parent=11 // pred_region
          _
        $region24: #{tpu_custom_call.1} parent=11 // pred_fallthru
          _
        // Predicated region
        $region25: #{tpu_custom_call.1} parent=11 // pred_check
          %p222 = pneg %p130
        $region26: #{tpu_custom_call.1} parent=11 // pred_check_branch
          %224 = sbr.rel (%p222) target = $region28
        $region27: #{tpu_custom_call.1} parent=11 // pred_region
          _
        $region28: #{tpu_custom_call.1} parent=11 // pred_fallthru
          _
        // Predicated region
        $region29: #{tpu_custom_call.1} parent=11 // pred_check
          %p225 = pneg %p151
        $region30: #{tpu_custom_call.1} parent=11 // pred_check_branch
          %227 = sbr.rel (%p225) target = $region32
        $region31: #{tpu_custom_call.1} parent=11 // pred_region
          _
        $region32: #{tpu_custom_call.1} parent=11 // pred_fallthru
          _
        // Predicated region
        $region33: #{tpu_custom_call.1} parent=11 // pred_check
          %p228 = pneg %p172
        $region34: #{tpu_custom_call.1} parent=11 // pred_check_branch
          %230 = sbr.rel (%p228) target = $region36
        $region35: #{tpu_custom_call.1} parent=11 // pred_region
          _
        $region36: #{tpu_custom_call.1} parent=11 // pred_fallthru
          _
      $region12: #{tpu_custom_call.1} parent=5 // pred_fallthru
        _
      %p231 = scmp.lt.s32.totalorder %s20, 2
      // Predicated region
      $region37: #{tpu_custom_call.1} parent=5 // pred_check
        %p232 = pneg %p231
      $region38: #{tpu_custom_call.1} parent=5 // pred_check_branch
        %234 = sbr.rel (%p232) target = $region40
      $region39: #{tpu_custom_call.1} parent=5 // pred_region
        // Predicated region
        $region41: #{tpu_custom_call.1} parent=39 // pred_check
          %p235 = pneg %p40
        $region42: #{tpu_custom_call.1} parent=39 // pred_check_branch
          %237 = sbr.rel (%p235) target = $region44
        $region43: #{tpu_custom_call.1} parent=39 // pred_region
          %s238 = sand.u32 %s30, 1
          %s239 = scalar_lea.sflag [#allocation4], %s238
          %s240 = sand.u32 %s30, 1
          %s241 = smul.addr %s240, 128
          %s242 = scalar_lea.vmem [#allocation3], %s241
          %s243 = smul.u32 8, %s20
          %s245 = ssub.s32 2048, 2048
          %246 = vsyncadd %s239, %s245
          %s247 = smul.addr %s243, 2
          %s248 = smul.addr %s247, 128
          %s249 = scalar_lea.hbm %s0, %s248
          %s250 = sshll.u32 %s242, 4
          %s251 = int_to_ptr.vmem [resolvable:$true] %s250
          %256 = dma.hbm_to_vmem [thread:$0]  %s249, 2048, %s251, %s239, 128, 128, 8
        $region44: #{tpu_custom_call.1} parent=39 // pred_fallthru
          _
      $region40: #{tpu_custom_call.1} parent=5 // pred_fallthru
        _
      %p257 = scmp.le.s32.totalorder 1, %s20
      %p258 = scmp.lt.s32.totalorder %s20, 3
      %p259 = pnand %p257, %p258
      %p260 = pneg %p259
      // Predicated region
      $region45: #{tpu_custom_call.1} parent=5 // pred_check
        _
      $region46: #{tpu_custom_call.1} parent=5 // pred_check_branch
        %262 = sbr.rel (%p259) target = $region48
      $region47: #{tpu_custom_call.1} parent=5 // pred_region
        %s263 = ssub.s32 %s20, 1
        %s264 = sand.u32 %s33, 1
        %s265 = scalar_lea.sflag [#allocation4], %s264
        %s266 = sand.u32 %s33, 1
        %s267 = smul.addr %s266, 128
        %s268 = scalar_lea.vmem [#allocation3], %s267
        // Predicated region
        $region49: #{tpu_custom_call.1} parent=47 // pred_check
          %p269 = pneg %p46
        $region50: #{tpu_custom_call.1} parent=47 // pred_check_branch
          %271 = sbr.rel (%p269) target = $region52
        $region51: #{tpu_custom_call.1} parent=47 // pred_region
          %272 = dma.done %s265, 2048
        $region52: #{tpu_custom_call.1} parent=47 // pred_fallthru
          _
        %s273 = sand.u32 %s33, 1
        %s274 = scalar_lea.sflag [#allocation4], %s273
        %s275 = sand.u32 %s33, 1
        %s276 = smul.addr %s275, 128
        %s277 = scalar_lea.vmem [#allocation3], %s276
        %p278 = pneg %p46
        %p279 = pneg %p43
        %p280 = pneg %p67
        %p281 = pneg %p64
        %p282 = pneg %p88
        %p283 = pneg %p85
        %p284 = pneg %p109
        %p285 = pneg %p106
        %p286 = pneg %p130
        %p287 = pneg %p127
        %p288 = pneg %p151
        %p289 = pneg %p148
        %p290 = pneg %p172
        %p291 = pneg %p169
        %p292 = pneg %p198
        %p293 = pneg %p195
        %s294 = sand.u32 %s185, 1
        %s295 = scalar_lea.sflag [#allocation5], %s294
        %s296 = sand.u32 %s185, 1
        %s297 = smul.addr %s296, 16
        %s298 = scalar_lea.vmem [#allocation6], %s297
        %s299 = smul.u32 8, %s25
        %v300 = vld [vmem:[%s268] sm:$0xff]
        %v301 = vld [vmem:[%s268 + $0x8] sm:$0xff]
        %v302 = vld [vmem:[%s268 + $0x10] sm:$0xff]
        %v303 = vld [vmem:[%s268 + $0x18] sm:$0xff]
        %v304 = vld [vmem:[%s268 + $0x20] sm:$0xff]
        %v305 = vld [vmem:[%s268 + $0x28] sm:$0xff]
        %v306 = vld [vmem:[%s268 + $0x30] sm:$0xff]
        %v307 = vld [vmem:[%s268 + $0x38] sm:$0xff]
        %v308 = vld [vmem:[%s268 + $0x40] sm:$0xff]
        %v309 = vld [vmem:[%s268 + $0x48] sm:$0xff]
        %v310 = vld [vmem:[%s268 + $0x50] sm:$0xff]
        %v311 = vld [vmem:[%s268 + $0x58] sm:$0xff]
        %v312 = vld [vmem:[%s268 + $0x60] sm:$0xff]
        %v313 = vld [vmem:[%s268 + $0x68] sm:$0xff]
        %v314 = vld [vmem:[%s268 + $0x70] sm:$0xff]
        %v315 = vld [vmem:[%s268 + $0x78] sm:$0xff]
        %vm316 = vcmask 261120
        %v317 = vsel %vm316, %v300, 0.0
        %v318 = vrot.slane %v317, 4
        %v319 = vadd.f32 %v317, %v318
        %v320 = vrot.slane %v319, 2
        %v321 = vadd.f32 %v319, %v320
        %v322 = vrot.slane %v321, 1
        %v323 = vadd.f32 %v321, %v322
        %v324 = vsel %vm316, %v301, 0.0
        %v325 = vrot.slane %v324, 4
        %v326 = vadd.f32 %v324, %v325
        %v327 = vrot.slane %v326, 2
        %v328 = vadd.f32 %v326, %v327
        %v329 = vrot.slane %v328, 1
        %v330 = vadd.f32 %v328, %v329
        %v331 = vsel %vm316, %v302, 0.0
        %v332 = vrot.slane %v331, 4
        %v333 = vadd.f32 %v331, %v332
        %v334 = vrot.slane %v333, 2
        %v335 = vadd.f32 %v333, %v334
        %v336 = vrot.slane %v335, 1
        %v337 = vadd.f32 %v335, %v336
        %v338 = vsel %vm316, %v303, 0.0
        %v339 = vrot.slane %v338, 4
        %v340 = vadd.f32 %v338, %v339
        %v341 = vrot.slane %v340, 2
        %v342 = vadd.f32 %v340, %v341
        %v343 = vrot.slane %v342, 1
        %v344 = vadd.f32 %v342, %v343
        %v345 = vsel %vm316, %v304, 0.0
        %v346 = vrot.slane %v345, 4
        %v347 = vadd.f32 %v345, %v346
        %v348 = vrot.slane %v347, 2
        %v349 = vadd.f32 %v347, %v348
        %v350 = vrot.slane %v349, 1
        %v351 = vadd.f32 %v349, %v350
        %v352 = vsel %vm316, %v305, 0.0
        %v353 = vrot.slane %v352, 4
        %v354 = vadd.f32 %v352, %v353
        %v355 = vrot.slane %v354, 2
        %v356 = vadd.f32 %v354, %v355
        %v357 = vrot.slane %v356, 1
        %v358 = vadd.f32 %v356, %v357
        %v359 = vsel %vm316, %v306, 0.0
        %v360 = vrot.slane %v359, 4
        %v361 = vadd.f32 %v359, %v360
        %v362 = vrot.slane %v361, 2
        %v363 = vadd.f32 %v361, %v362
        %v364 = vrot.slane %v363, 1
        %v365 = vadd.f32 %v363, %v364
        %v366 = vsel %vm316, %v307, 0.0
        %v367 = vrot.slane %v366, 4
        %v368 = vadd.f32 %v366, %v367
        %v369 = vrot.slane %v368, 2
        %v370 = vadd.f32 %v368, %v369
        %v371 = vrot.slane %v370, 1
        %v372 = vadd.f32 %v370, %v371
        %v373 = vsel %vm316, %v308, 0.0
        %v374 = vrot.slane %v373, 4
        %v375 = vadd.f32 %v373, %v374
        %v376 = vrot.slane %v375, 2
        %v377 = vadd.f32 %v375, %v376
        %v378 = vrot.slane %v377, 1
        %v379 = vadd.f32 %v377, %v378
        %v380 = vsel %vm316, %v309, 0.0
        %v381 = vrot.slane %v380, 4
        %v382 = vadd.f32 %v380, %v381
        %v383 = vrot.slane %v382, 2
        %v384 = vadd.f32 %v382, %v383
        %v385 = vrot.slane %v384, 1
        %v386 = vadd.f32 %v384, %v385
        %v387 = vsel %vm316, %v310, 0.0
        %v388 = vrot.slane %v387, 4
        %v389 = vadd.f32 %v387, %v388
        %v390 = vrot.slane %v389, 2
        %v391 = vadd.f32 %v389, %v390
        %v392 = vrot.slane %v391, 1
        %v393 = vadd.f32 %v391, %v392
        %v394 = vsel %vm316, %v311, 0.0
        %v395 = vrot.slane %v394, 4
        %v396 = vadd.f32 %v394, %v395
        %v397 = vrot.slane %v396, 2
        %v398 = vadd.f32 %v396, %v397
        %v399 = vrot.slane %v398, 1
        %v400 = vadd.f32 %v398, %v399
        %v401 = vsel %vm316, %v312, 0.0
        %v402 = vrot.slane %v401, 4
        %v403 = vadd.f32 %v401, %v402
        %v404 = vrot.slane %v403, 2
        %v405 = vadd.f32 %v403, %v404
        %v406 = vrot.slane %v405, 1
        %v407 = vadd.f32 %v405, %v406
        %v408 = vsel %vm316, %v313, 0.0
        %v409 = vrot.slane %v408, 4
        %v410 = vadd.f32 %v408, %v409
        %v411 = vrot.slane %v410, 2
        %v412 = vadd.f32 %v410, %v411
        %v413 = vrot.slane %v412, 1
        %v414 = vadd.f32 %v412, %v413
        %v415 = vsel %vm316, %v314, 0.0
        %v416 = vrot.slane %v415, 4
        %v417 = vadd.f32 %v415, %v416
        %v418 = vrot.slane %v417, 2
        %v419 = vadd.f32 %v417, %v418
        %v420 = vrot.slane %v419, 1
        %v421 = vadd.f32 %v419, %v420
        %v422 = vsel %vm316, %v315, 0.0
        %v423 = vrot.slane %v422, 4
        %v424 = vadd.f32 %v422, %v423
        %v425 = vrot.slane %v424, 2
        %v426 = vadd.f32 %v424, %v425
        %v427 = vrot.slane %v426, 1
        %v428 = vadd.f32 %v426, %v427
        %v429 = vld [vmem:[%s1] sm:$0xff]
        %v430 = vld [vmem:[%s1 + $0x8] sm:$0xff]
        %v431 = vld [vmem:[%s1 + $0x10] sm:$0xff]
        %v432 = vld [vmem:[%s1 + $0x18] sm:$0xff]
        %v433 = vld [vmem:[%s2] sm:$0x1]
        %v435 = vlaneseq
        %v436 = vshrl.u32 %v435, 7
        %v437 = vsub.s32 0, %v436
        %v438 = vrot.slane %v433, %v437
        %vm456 = vcmask 1041409
        %v457 = vsel %vm456, %v330, %v323
        %vm458 = vcmask 1042434
        %v459 = vsel %vm458, %v337, %v457
        %vm460 = vcmask 1043459
        %v461 = vsel %vm460, %v344, %v459
        %vm462 = vcmask 1044484
        %v463 = vsel %vm462, %v351, %v461
        %vm464 = vcmask 1045509
        %v465 = vsel %vm464, %v358, %v463
        %vm466 = vcmask 1046534
        %v467 = vsel %vm466, %v365, %v465
        %vm468 = vcmask 1047559
        %v469 = vsel %vm468, %v372, %v467
        %v470 = vsel %vm456, %v386, %v379
        %v471 = vsel %vm458, %v393, %v470
        %v472 = vsel %vm460, %v400, %v471
        %v473 = vsel %vm462, %v407, %v472
        %v474 = vsel %vm464, %v414, %v473
        %v475 = vsel %vm466, %v421, %v474
        %v476 = vsel %vm468, %v428, %v475
        %v477 = vsel %vm316, %v469, 0
        %v479 = vsel %vm316, %v476, 0
        %481 = vmatprep.subr.mxu0 0.0
        %482 = vmatpush1.msra.mxu0 0.0
        %483 = vmatprep.subr.mxu0 0.0
        %484 = vmatpush1.msra.mxu0 0.0
        %485 = vmatprep.subr.mxu0 0.0
        %486 = vmatpush1.msra.mxu0 0.0
        %487 = vmatprep.subr.mxu0 0.0
        %488 = vmatpush1.msra.mxu0 0.0
        %489 = vmatprep.subr.mxu0 0.0
        %490 = vmatpush1.msra.mxu0 0.0
        %491 = vmatprep.subr.mxu0 0.0
        %492 = vmatpush1.msra.mxu0 0.0
        %493 = vmatprep.subr.mxu0 0.0
        %494 = vmatpush1.msra.mxu0 0.0
        %495 = vmatprep.subr.mxu0 0.0
        %496 = vmatpush1.msra.mxu0 0.0
        %497 = vmatprep.subr.mxu0 0.0
        %498 = vmatpush1.msra.mxu0 0.0
        %499 = vmatprep.subr.mxu0 0.0
        %500 = vmatpush1.msra.mxu0 0.0
        %501 = vmatprep.subr.mxu0 0.0
        %502 = vmatpush1.msra.mxu0 0.0
        %503 = vmatprep.subr.mxu0 0.0
        %504 = vmatpush1.msra.mxu0 0.0
        %505 = vmatprep.subr.mxu0 0.0
        %506 = vmatpush1.msra.mxu0 %v432
        %507 = vmatprep.subr.mxu0 0.0
        %508 = vmatpush1.msra.mxu0 %v431
        %509 = vmatprep.subr.mxu0 0.0
        %510 = vmatpush1.msra.mxu0 %v430
        %511 = vmatprep.subr.mxu0 0.0
        %512 = vmatpush1.msra.mxu0 %v429
        %513 = vmatprep.subr.mxu0 0.0
        %514 = vmatpush2.msra.mxu0 0.0
        %515 = vmatprep.subr.mxu0 0.0
        %516 = vmatpush2.msra.mxu0 0.0
        %517 = vmatprep.subr.mxu0 0.0
        %518 = vmatpush2.msra.mxu0 0.0
        %519 = vmatprep.subr.mxu0 0.0
        %520 = vmatpush2.msra.mxu0 0.0
        %521 = vmatprep.subr.mxu0 0.0
        %522 = vmatpush2.msra.mxu0 0.0
        %523 = vmatprep.subr.mxu0 0.0
        %524 = vmatpush2.msra.mxu0 0.0
        %525 = vmatprep.subr.mxu0 0.0
        %526 = vmatpush2.msra.mxu0 0.0
        %527 = vmatprep.subr.mxu0 0.0
        %528 = vmatpush2.msra.mxu0 0.0
        %529 = vmatprep.subr.mxu0 0.0
        %530 = vmatpush2.msra.mxu0 0.0
        %531 = vmatprep.subr.mxu0 0.0
        %532 = vmatpush2.msra.mxu0 0.0
        %533 = vmatprep.subr.mxu0 0.0
        %534 = vmatpush2.msra.mxu0 0.0
        %535 = vmatprep.subr.mxu0 0.0
        %536 = vmatpush2.msra.mxu0 0.0
        %537 = vmatprep.subr.mxu0 0.0
        %538 = vmatpush2.msra.mxu0 0.0
        %539 = vmatprep.subr.mxu0 0.0
        %540 = vmatpush2.msra.mxu0 0.0
        %541 = vmatprep.subr.mxu0 0.0
        %542 = vmatpush2.msra.mxu0 0.0
        %543 = vmatprep.subr.mxu0 0.0
        %544 = vmatpush2.msra.mxu0 0.0
        %545 = vmatprep.mubr.f32.mxu0 0.0
        %546 = vmatmul.mubr.f32.gmra.mxu0 %v477
        %v547 = vpop.f32.mrf.mxu0
        %v548 = vadd.f32 %v438, %v547
        %v549 = vpop.f32.mrf.mxu0
        %550 = vmatprep.mubr.f32.mxu0 0.0
        %551 = vmatmul.mubr.f32.gmra.mxu0 %v479
        %v552 = vpop.f32.mrf.mxu0
        %v553 = vadd.f32 %v438, %v552
        %v554 = vpop.f32.mrf.mxu0
        %555 = vdwg.mxu0
        %v556 = vmax.f32 %v548, 0.0
        %v557 = vmax.f32 %v553, 0.0
        %v558 = vld [vmem:[%s3] sm:$0x1]
        %v560 = vlaneseq
        %v561 = vshrl.u32 %v560, 7
        %v562 = vsub.s32 0, %v561
        %v563 = vrot.slane %v558, %v562
        %v565 = vmul.f32 %v556, %v563
        %v566 = vmul.f32 %v557, %v563
        %vm567 = vcmask 64512
        %v568 = vsel %vm567, %v565, 0.0
        %569 = vadd.xlane.f32.xlu0 %v568
        %v570 = vpop.xlane.xlu0 %569
        %v571 = vsel %vm567, %v566, 0.0
        %572 = vadd.xlane.f32.xlu0 %v571
        %v573 = vpop.xlane.xlu0 %572
        %s574 = sld [smem:[#allocation2]]
        %v575 = vstv %s574
        %v576 = vadd.f32 %v570, %v575
        %v577 = vadd.f32 %v573, %v575
        %v578 = vxor.u32 %v576, 2147483648
        %v579 = vxor.u32 %v577, 2147483648
        %v580 = vmul.f32 %v578, 1.442695
        %v581 = vpow.pop %v580
        %v582 = vmul.f32 %v579, 1.442695
        %v583 = vpow.pop %v582
        %v584 = vadd.f32 %v581, 1.0
        %v585 = vadd.f32 %v583, 1.0
        %v586 = vrcp.pop %v584
        %v587 = vmul.f32 1.0, %v586
        %v588 = vrcp.pop %v585
        %v589 = vmul.f32 1.0, %v588
        %v592 = vlaneseq
        %v593 = vshrl.u32 %v592, 7
        %v594 = vsub.s32 0, %v593
        %v595 = vrot.slane %v587, %v594
        %v596 = vlaneseq
        %v597 = vshrl.u32 %v596, 7
        %v598 = vsub.s32 1, %v597
        %v599 = vrot.slane %v587, %v598
        %v600 = vlaneseq
        %v601 = vshrl.u32 %v600, 7
        %v602 = vsub.s32 2, %v601
        %v603 = vrot.slane %v587, %v602
        %v604 = vlaneseq
        %v605 = vshrl.u32 %v604, 7
        %v606 = vsub.s32 3, %v605
        %v607 = vrot.slane %v587, %v606
        %v608 = vlaneseq
        %v609 = vshrl.u32 %v608, 7
        %v610 = vsub.s32 4, %v609
        %v611 = vrot.slane %v587, %v610
        %v612 = vlaneseq
        %v613 = vshrl.u32 %v612, 7
        %v614 = vsub.s32 5, %v613
        %v615 = vrot.slane %v587, %v614
        %v616 = vlaneseq
        %v617 = vshrl.u32 %v616, 7
        %v618 = vsub.s32 6, %v617
        %v619 = vrot.slane %v587, %v618
        %v620 = vlaneseq
        %v621 = vshrl.u32 %v620, 7
        %v622 = vsub.s32 7, %v621
        %v623 = vrot.slane %v587, %v622
        %v624 = vlaneseq
        %v625 = vshrl.u32 %v624, 7
        %v626 = vsub.s32 0, %v625
        %v627 = vrot.slane %v589, %v626
        %v628 = vlaneseq
        %v629 = vshrl.u32 %v628, 7
        %v630 = vsub.s32 1, %v629
        %v631 = vrot.slane %v589, %v630
        %v632 = vlaneseq
        %v633 = vshrl.u32 %v632, 7
        %v634 = vsub.s32 2, %v633
        %v635 = vrot.slane %v589, %v634
        %v636 = vlaneseq
        %v637 = vshrl.u32 %v636, 7
        %v638 = vsub.s32 3, %v637
        %v639 = vrot.slane %v589, %v638
        %v640 = vlaneseq
        %v641 = vshrl.u32 %v640, 7
        %v642 = vsub.s32 4, %v641
        %v643 = vrot.slane %v589, %v642
        %v644 = vlaneseq
        %v645 = vshrl.u32 %v644, 7
        %v646 = vsub.s32 5, %v645
        %v647 = vrot.slane %v589, %v646
        %v648 = vlaneseq
        %v649 = vshrl.u32 %v648, 7
        %v650 = vsub.s32 6, %v649
        %v651 = vrot.slane %v589, %v650
        %v652 = vlaneseq
        %v653 = vshrl.u32 %v652, 7
        %v654 = vsub.s32 7, %v653
        %v655 = vrot.slane %v589, %v654
        %v672 = vmul.f32 %v300, %v595
        %v673 = vmul.f32 %v301, %v599
        %v674 = vmul.f32 %v302, %v603
        %v675 = vmul.f32 %v303, %v607
        %v676 = vmul.f32 %v304, %v611
        %v677 = vmul.f32 %v305, %v615
        %v678 = vmul.f32 %v306, %v619
        %v679 = vmul.f32 %v307, %v623
        %v680 = vmul.f32 %v308, %v627
        %v681 = vmul.f32 %v309, %v631
        %v682 = vmul.f32 %v310, %v635
        %v683 = vmul.f32 %v311, %v639
        %v684 = vmul.f32 %v312, %v643
        %v685 = vmul.f32 %v313, %v647
        %v686 = vmul.f32 %v314, %v651
        %v687 = vmul.f32 %v315, %v655
        %v688 = vld [vmem:[%s5] sm:$0xff]
        %v689 = vld [vmem:[%s5 + $0x8] sm:$0xff]
        %v690 = vld [vmem:[%s6] sm:$0x1]
        %v692 = vlaneseq
        %v693 = vshrl.u32 %v692, 7
        %v694 = vsub.s32 0, %v693
        %v695 = vrot.slane %v690, %v694
        %697 = vxpose.xlu0.b32.start [1/16] %v672, 128
        %698 = vxpose.xlu0.b32.cont [2/16] %v673, 128
        %699 = vxpose.xlu0.b32.cont [3/16] 0.0, 128
        %700 = vxpose.xlu0.b32.cont [4/16] 0.0, 128
        %701 = vxpose.xlu0.b32.cont [5/16] 0.0, 128
        %702 = vxpose.xlu0.b32.cont [6/16] 0.0, 128
        %703 = vxpose.xlu0.b32.cont [7/16] 0.0, 128
        %704 = vxpose.xlu0.b32.cont [8/16] 0.0, 128
        %705 = vxpose.xlu0.b32.cont [9/16] 0.0, 128
        %706 = vxpose.xlu0.b32.cont [10/16] 0.0, 128
        %707 = vxpose.xlu0.b32.cont [11/16] 0.0, 128
        %708 = vxpose.xlu0.b32.cont [12/16] 0.0, 128
        %709 = vxpose.xlu0.b32.cont [13/16] 0.0, 128
        %710 = vxpose.xlu0.b32.cont [14/16] 0.0, 128
        %711 = vxpose.xlu0.b32.cont [15/16] 0.0, 128
        %712 = vxpose.xlu0.b32.end [16/16] 0.0, 128
        %v713 = vpop.trf.xlu0
        %v714 = vpop.trf.xlu0
        %v715 = vpop.trf.xlu0
        %v716 = vpop.trf.xlu0
        %v717 = vpop.trf.xlu0
        %v718 = vpop.trf.xlu0
        %v719 = vpop.trf.xlu0
        %v720 = vpop.trf.xlu0
        %v721 = vpop.trf.xlu0
        %v722 = vpop.trf.xlu0
        %v723 = vpop.trf.xlu0
        %v724 = vpop.trf.xlu0
        %v725 = vpop.trf.xlu0
        %v726 = vpop.trf.xlu0
        %v727 = vpop.trf.xlu0
        %v728 = vpop.trf.xlu0
        %729 = vxpose.xlu0.b32.start [1/16] %v674, 128
        %730 = vxpose.xlu0.b32.cont [2/16] %v675, 128
        %731 = vxpose.xlu0.b32.cont [3/16] 0.0, 128
        %732 = vxpose.xlu0.b32.cont [4/16] 0.0, 128
        %733 = vxpose.xlu0.b32.cont [5/16] 0.0, 128
        %734 = vxpose.xlu0.b32.cont [6/16] 0.0, 128
        %735 = vxpose.xlu0.b32.cont [7/16] 0.0, 128
        %736 = vxpose.xlu0.b32.cont [8/16] 0.0, 128
        %737 = vxpose.xlu0.b32.cont [9/16] 0.0, 128
        %738 = vxpose.xlu0.b32.cont [10/16] 0.0, 128
        %739 = vxpose.xlu0.b32.cont [11/16] 0.0, 128
        %740 = vxpose.xlu0.b32.cont [12/16] 0.0, 128
        %741 = vxpose.xlu0.b32.cont [13/16] 0.0, 128
        %742 = vxpose.xlu0.b32.cont [14/16] 0.0, 128
        %743 = vxpose.xlu0.b32.cont [15/16] 0.0, 128
        %744 = vxpose.xlu0.b32.end [16/16] 0.0, 128
        %v745 = vpop.trf.xlu0
        %v746 = vpop.trf.xlu0
        %v747 = vpop.trf.xlu0
        %v748 = vpop.trf.xlu0
        %v749 = vpop.trf.xlu0
        %v750 = vpop.trf.xlu0
        %v751 = vpop.trf.xlu0
        %v752 = vpop.trf.xlu0
        %v753 = vpop.trf.xlu0
        %v754 = vpop.trf.xlu0
        %v755 = vpop.trf.xlu0
        %v756 = vpop.trf.xlu0
        %v757 = vpop.trf.xlu0
        %v758 = vpop.trf.xlu0
        %v759 = vpop.trf.xlu0
        %v760 = vpop.trf.xlu0
        %761 = vxpose.xlu0.b32.start [1/16] %v676, 128
        %762 = vxpose.xlu0.b32.cont [2/16] %v677, 128
        %763 = vxpose.xlu0.b32.cont [3/16] 0.0, 128
        %764 = vxpose.xlu0.b32.cont [4/16] 0.0, 128
        %765 = vxpose.xlu0.b32.cont [5/16] 0.0, 128
        %766 = vxpose.xlu0.b32.cont [6/16] 0.0, 128
        %767 = vxpose.xlu0.b32.cont [7/16] 0.0, 128
        %768 = vxpose.xlu0.b32.cont [8/16] 0.0, 128
        %769 = vxpose.xlu0.b32.cont [9/16] 0.0, 128
        %770 = vxpose.xlu0.b32.cont [10/16] 0.0, 128
        %771 = vxpose.xlu0.b32.cont [11/16] 0.0, 128
        %772 = vxpose.xlu0.b32.cont [12/16] 0.0, 128
        %773 = vxpose.xlu0.b32.cont [13/16] 0.0, 128
        %774 = vxpose.xlu0.b32.cont [14/16] 0.0, 128
        %775 = vxpose.xlu0.b32.cont [15/16] 0.0, 128
        %776 = vxpose.xlu0.b32.end [16/16] 0.0, 128
        %v777 = vpop.trf.xlu0
        %v778 = vpop.trf.xlu0
        %v779 = vpop.trf.xlu0
        %v780 = vpop.trf.xlu0
        %v781 = vpop.trf.xlu0
        %v782 = vpop.trf.xlu0
        %v783 = vpop.trf.xlu0
        %v784 = vpop.trf.xlu0
        %v785 = vpop.trf.xlu0
        %v786 = vpop.trf.xlu0
        %v787 = vpop.trf.xlu0
        %v788 = vpop.trf.xlu0
        %v789 = vpop.trf.xlu0
        %v790 = vpop.trf.xlu0
        %v791 = vpop.trf.xlu0
        %v792 = vpop.trf.xlu0
        %793 = vxpose.xlu0.b32.start [1/16] %v678, 128
        %794 = vxpose.xlu0.b32.cont [2/16] %v679, 128
        %795 = vxpose.xlu0.b32.cont [3/16] 0.0, 128
        %796 = vxpose.xlu0.b32.cont [4/16] 0.0, 128
        %797 = vxpose.xlu0.b32.cont [5/16] 0.0, 128
        %798 = vxpose.xlu0.b32.cont [6/16] 0.0, 128
        %799 = vxpose.xlu0.b32.cont [7/16] 0.0, 128
        %800 = vxpose.xlu0.b32.cont [8/16] 0.0, 128
        %801 = vxpose.xlu0.b32.cont [9/16] 0.0, 128
        %802 = vxpose.xlu0.b32.cont [10/16] 0.0, 128
        %803 = vxpose.xlu0.b32.cont [11/16] 0.0, 128
        %804 = vxpose.xlu0.b32.cont [12/16] 0.0, 128
        %805 = vxpose.xlu0.b32.cont [13/16] 0.0, 128
        %806 = vxpose.xlu0.b32.cont [14/16] 0.0, 128
        %807 = vxpose.xlu0.b32.cont [15/16] 0.0, 128
        %808 = vxpose.xlu0.b32.end [16/16] 0.0, 128
        %v809 = vpop.trf.xlu0
        %v810 = vpop.trf.xlu0
        %v811 = vpop.trf.xlu0
        %v812 = vpop.trf.xlu0
        %v813 = vpop.trf.xlu0
        %v814 = vpop.trf.xlu0
        %v815 = vpop.trf.xlu0
        %v816 = vpop.trf.xlu0
        %v817 = vpop.trf.xlu0
        %v818 = vpop.trf.xlu0
        %v819 = vpop.trf.xlu0
        %v820 = vpop.trf.xlu0
        %v821 = vpop.trf.xlu0
        %v822 = vpop.trf.xlu0
        %v823 = vpop.trf.xlu0
        %v824 = vpop.trf.xlu0
        %825 = vxpose.xlu0.b32.start [1/16] %v680, 128
        %826 = vxpose.xlu0.b32.cont [2/16] %v681, 128
        %827 = vxpose.xlu0.b32.cont [3/16] 0.0, 128
        %828 = vxpose.xlu0.b32.cont [4/16] 0.0, 128
        %829 = vxpose.xlu0.b32.cont [5/16] 0.0, 128
        %830 = vxpose.xlu0.b32.cont [6/16] 0.0, 128
        %831 = vxpose.xlu0.b32.cont [7/16] 0.0, 128
        %832 = vxpose.xlu0.b32.cont [8/16] 0.0, 128
        %833 = vxpose.xlu0.b32.cont [9/16] 0.0, 128
        %834 = vxpose.xlu0.b32.cont [10/16] 0.0, 128
        %835 = vxpose.xlu0.b32.cont [11/16] 0.0, 128
        %836 = vxpose.xlu0.b32.cont [12/16] 0.0, 128
        %837 = vxpose.xlu0.b32.cont [13/16] 0.0, 128
        %838 = vxpose.xlu0.b32.cont [14/16] 0.0, 128
        %839 = vxpose.xlu0.b32.cont [15/16] 0.0, 128
        %840 = vxpose.xlu0.b32.end [16/16] 0.0, 128
        %v841 = vpop.trf.xlu0
        %v842 = vpop.trf.xlu0
        %v843 = vpop.trf.xlu0
        %v844 = vpop.trf.xlu0
        %v845 = vpop.trf.xlu0
        %v846 = vpop.trf.xlu0
        %v847 = vpop.trf.xlu0
        %v848 = vpop.trf.xlu0
        %v849 = vpop.trf.xlu0
        %v850 = vpop.trf.xlu0
        %v851 = vpop.trf.xlu0
        %v852 = vpop.trf.xlu0
        %v853 = vpop.trf.xlu0
        %v854 = vpop.trf.xlu0
        %v855 = vpop.trf.xlu0
        %v856 = vpop.trf.xlu0
        %857 = vxpose.xlu0.b32.start [1/16] %v682, 128
        %858 = vxpose.xlu0.b32.cont [2/16] %v683, 128
        %859 = vxpose.xlu0.b32.cont [3/16] 0.0, 128
        %860 = vxpose.xlu0.b32.cont [4/16] 0.0, 128
        %861 = vxpose.xlu0.b32.cont [5/16] 0.0, 128
        %862 = vxpose.xlu0.b32.cont [6/16] 0.0, 128
        %863 = vxpose.xlu0.b32.cont [7/16] 0.0, 128
        %864 = vxpose.xlu0.b32.cont [8/16] 0.0, 128
        %865 = vxpose.xlu0.b32.cont [9/16] 0.0, 128
        %866 = vxpose.xlu0.b32.cont [10/16] 0.0, 128
        %867 = vxpose.xlu0.b32.cont [11/16] 0.0, 128
        %868 = vxpose.xlu0.b32.cont [12/16] 0.0, 128
        %869 = vxpose.xlu0.b32.cont [13/16] 0.0, 128
        %870 = vxpose.xlu0.b32.cont [14/16] 0.0, 128
        %871 = vxpose.xlu0.b32.cont [15/16] 0.0, 128
        %872 = vxpose.xlu0.b32.end [16/16] 0.0, 128
        %v873 = vpop.trf.xlu0
        %v874 = vpop.trf.xlu0
        %v875 = vpop.trf.xlu0
        %v876 = vpop.trf.xlu0
        %v877 = vpop.trf.xlu0
        %v878 = vpop.trf.xlu0
        %v879 = vpop.trf.xlu0
        %v880 = vpop.trf.xlu0
        %v881 = vpop.trf.xlu0
        %v882 = vpop.trf.xlu0
        %v883 = vpop.trf.xlu0
        %v884 = vpop.trf.xlu0
        %v885 = vpop.trf.xlu0
        %v886 = vpop.trf.xlu0
        %v887 = vpop.trf.xlu0
        %v888 = vpop.trf.xlu0
        %889 = vxpose.xlu0.b32.start [1/16] %v684, 128
        %890 = vxpose.xlu0.b32.cont [2/16] %v685, 128
        %891 = vxpose.xlu0.b32.cont [3/16] 0.0, 128
        %892 = vxpose.xlu0.b32.cont [4/16] 0.0, 128
        %893 = vxpose.xlu0.b32.cont [5/16] 0.0, 128
        %894 = vxpose.xlu0.b32.cont [6/16] 0.0, 128
        %895 = vxpose.xlu0.b32.cont [7/16] 0.0, 128
        %896 = vxpose.xlu0.b32.cont [8/16] 0.0, 128
        %897 = vxpose.xlu0.b32.cont [9/16] 0.0, 128
        %898 = vxpose.xlu0.b32.cont [10/16] 0.0, 128
        %899 = vxpose.xlu0.b32.cont [11/16] 0.0, 128
        %900 = vxpose.xlu0.b32.cont [12/16] 0.0, 128
        %901 = vxpose.xlu0.b32.cont [13/16] 0.0, 128
        %902 = vxpose.xlu0.b32.cont [14/16] 0.0, 128
        %903 = vxpose.xlu0.b32.cont [15/16] 0.0, 128
        %904 = vxpose.xlu0.b32.end [16/16] 0.0, 128
        %v905 = vpop.trf.xlu0
        %v906 = vpop.trf.xlu0
        %v907 = vpop.trf.xlu0
        %v908 = vpop.trf.xlu0
        %v909 = vpop.trf.xlu0
        %v910 = vpop.trf.xlu0
        %v911 = vpop.trf.xlu0
        %v912 = vpop.trf.xlu0
        %v913 = vpop.trf.xlu0
        %v914 = vpop.trf.xlu0
        %v915 = vpop.trf.xlu0
        %v916 = vpop.trf.xlu0
        %v917 = vpop.trf.xlu0
        %v918 = vpop.trf.xlu0
        %v919 = vpop.trf.xlu0
        %v920 = vpop.trf.xlu0
        %921 = vxpose.xlu0.b32.start [1/16] %v686, 128
        %922 = vxpose.xlu0.b32.cont [2/16] %v687, 128
        %923 = vxpose.xlu0.b32.cont [3/16] 0.0, 128
        %924 = vxpose.xlu0.b32.cont [4/16] 0.0, 128
        %925 = vxpose.xlu0.b32.cont [5/16] 0.0, 128
        %926 = vxpose.xlu0.b32.cont [6/16] 0.0, 128
        %927 = vxpose.xlu0.b32.cont [7/16] 0.0, 128
        %928 = vxpose.xlu0.b32.cont [8/16] 0.0, 128
        %929 = vxpose.xlu0.b32.cont [9/16] 0.0, 128
        %930 = vxpose.xlu0.b32.cont [10/16] 0.0, 128
        %931 = vxpose.xlu0.b32.cont [11/16] 0.0, 128
        %932 = vxpose.xlu0.b32.cont [12/16] 0.0, 128
        %933 = vxpose.xlu0.b32.cont [13/16] 0.0, 128
        %934 = vxpose.xlu0.b32.cont [14/16] 0.0, 128
        %935 = vxpose.xlu0.b32.cont [15/16] 0.0, 128
        %936 = vxpose.xlu0.b32.end [16/16] 0.0, 128
        %v937 = vpop.trf.xlu0
        %v938 = vpop.trf.xlu0
        %v939 = vpop.trf.xlu0
        %v940 = vpop.trf.xlu0
        %v941 = vpop.trf.xlu0
        %v942 = vpop.trf.xlu0
        %v943 = vpop.trf.xlu0
        %v944 = vpop.trf.xlu0
        %v945 = vpop.trf.xlu0
        %v946 = vpop.trf.xlu0
        %v947 = vpop.trf.xlu0
        %v948 = vpop.trf.xlu0
        %v949 = vpop.trf.xlu0
        %v950 = vpop.trf.xlu0
        %v951 = vpop.trf.xlu0
        %v952 = vpop.trf.xlu0
        %vm953 = vcmask 130048
        %v955 = vsel %vm953, %v713, 0
        %v958 = vsel %vm953, %v714, 0
        %v961 = vsel %vm953, %v715, 0
        %v964 = vsel %vm953, %v716, 0
        %v967 = vsel %vm953, %v745, 0
        %v970 = vsel %vm953, %v746, 0
        %v973 = vsel %vm953, %v747, 0
        %v976 = vsel %vm953, %v748, 0
        %v979 = vsel %vm953, %v777, 0
        %v982 = vsel %vm953, %v778, 0
        %v985 = vsel %vm953, %v779, 0
        %v988 = vsel %vm953, %v780, 0
        %v991 = vsel %vm953, %v809, 0
        %v994 = vsel %vm953, %v810, 0
        %v997 = vsel %vm953, %v811, 0
        %v1000 = vsel %vm953, %v812, 0
        %v1003 = vsel %vm953, %v841, 0
        %v1006 = vsel %vm953, %v842, 0
        %v1009 = vsel %vm953, %v843, 0
        %v1012 = vsel %vm953, %v844, 0
        %v1015 = vsel %vm953, %v873, 0
        %v1018 = vsel %vm953, %v874, 0
        %v1021 = vsel %vm953, %v875, 0
        %v1024 = vsel %vm953, %v876, 0
        %v1027 = vsel %vm953, %v905, 0
        %v1030 = vsel %vm953, %v906, 0
        %v1033 = vsel %vm953, %v907, 0
        %v1036 = vsel %vm953, %v908, 0
        %v1039 = vsel %vm953, %v937, 0
        %v1042 = vsel %vm953, %v938, 0
        %v1045 = vsel %vm953, %v939, 0
        %v1048 = vsel %vm953, %v940, 0
        %1050 = vmatprep.subr.mxu0 0.0
        %1051 = vmatpush1.msra.mxu0 0.0
        %1052 = vmatprep.subr.mxu0 0.0
        %1053 = vmatpush1.msra.mxu0 0.0
        %1054 = vmatprep.subr.mxu0 0.0
        %1055 = vmatpush1.msra.mxu0 0.0
        %1056 = vmatprep.subr.mxu0 0.0
        %1057 = vmatpush1.msra.mxu0 0.0
        %1058 = vmatprep.subr.mxu0 0.0
        %1059 = vmatpush1.msra.mxu0 0.0
        %1060 = vmatprep.subr.mxu0 0.0
        %1061 = vmatpush1.msra.mxu0 0.0
        %1062 = vmatprep.subr.mxu0 0.0
        %1063 = vmatpush1.msra.mxu0 0.0
        %1064 = vmatprep.subr.mxu0 0.0
        %1065 = vmatpush1.msra.mxu0 0.0
        %1066 = vmatprep.subr.mxu0 0.0
        %1067 = vmatpush1.msra.mxu0 0.0
        %1068 = vmatprep.subr.mxu0 0.0
        %1069 = vmatpush1.msra.mxu0 0.0
        %1070 = vmatprep.subr.mxu0 0.0
        %1071 = vmatpush1.msra.mxu0 0.0
        %1072 = vmatprep.subr.mxu0 0.0
        %1073 = vmatpush1.msra.mxu0 0.0
        %1074 = vmatprep.subr.mxu0 0.0
        %1075 = vmatpush1.msra.mxu0 0.0
        %1076 = vmatprep.subr.mxu0 0.0
        %1077 = vmatpush1.msra.mxu0 0.0
        %1078 = vmatprep.subr.mxu0 0.0
        %1079 = vmatpush1.msra.mxu0 %v689
        %1080 = vmatprep.subr.mxu0 0.0
        %1081 = vmatpush1.msra.mxu0 %v688
        %1082 = vmatprep.subr.mxu0 0.0
        %1083 = vmatpush2.msra.mxu0 0.0
        %1084 = vmatprep.subr.mxu0 0.0
        %1085 = vmatpush2.msra.mxu0 0.0
        %1086 = vmatprep.subr.mxu0 0.0
        %1087 = vmatpush2.msra.mxu0 0.0
        %1088 = vmatprep.subr.mxu0 0.0
        %1089 = vmatpush2.msra.mxu0 0.0
        %1090 = vmatprep.subr.mxu0 0.0
        %1091 = vmatpush2.msra.mxu0 0.0
        %1092 = vmatprep.subr.mxu0 0.0
        %1093 = vmatpush2.msra.mxu0 0.0
        %1094 = vmatprep.subr.mxu0 0.0
        %1095 = vmatpush2.msra.mxu0 0.0
        %1096 = vmatprep.subr.mxu0 0.0
        %1097 = vmatpush2.msra.mxu0 0.0
        %1098 = vmatprep.subr.mxu0 0.0
        %1099 = vmatpush2.msra.mxu0 0.0
        %1100 = vmatprep.subr.mxu0 0.0
        %1101 = vmatpush2.msra.mxu0 0.0
        %1102 = vmatprep.subr.mxu0 0.0
        %1103 = vmatpush2.msra.mxu0 0.0
        %1104 = vmatprep.subr.mxu0 0.0
        %1105 = vmatpush2.msra.mxu0 0.0
        %1106 = vmatprep.subr.mxu0 0.0
        %1107 = vmatpush2.msra.mxu0 0.0
        %1108 = vmatprep.subr.mxu0 0.0
        %1109 = vmatpush2.msra.mxu0 0.0
        %1110 = vmatprep.subr.mxu0 0.0
        %1111 = vmatpush2.msra.mxu0 0.0
        %1112 = vmatprep.subr.mxu0 0.0
        %1113 = vmatpush2.msra.mxu0 0.0
        %1114 = vmatprep.mubr.f32.mxu0 0.0
        %1115 = vmatmul.mubr.f32.gmra.mxu0 %v955
        %v1116 = vpop.f32.mrf.mxu0
        %v1117 = vadd.f32 %v695, %v1116
        %v1118 = vpop.f32.mrf.mxu0
        %1119 = vmatprep.mubr.f32.mxu0 0.0
        %1120 = vmatmul.mubr.f32.gmra.mxu0 %v958
        %v1121 = vpop.f32.mrf.mxu0
        %v1122 = vadd.f32 %v695, %v1121
        %v1123 = vpop.f32.mrf.mxu0
        %1124 = vmatprep.mubr.f32.mxu0 0.0
        %1125 = vmatmul.mubr.f32.gmra.mxu0 %v961
        %v1126 = vpop.f32.mrf.mxu0
        %v1127 = vadd.f32 %v695, %v1126
        %v1128 = vpop.f32.mrf.mxu0
        %1129 = vmatprep.mubr.f32.mxu0 0.0
        %1130 = vmatmul.mubr.f32.gmra.mxu0 %v964
        %v1131 = vpop.f32.mrf.mxu0
        %v1132 = vadd.f32 %v695, %v1131
        %v1133 = vpop.f32.mrf.mxu0
        %1134 = vmatprep.mubr.f32.mxu0 0.0
        %1135 = vmatmul.mubr.f32.gmra.mxu0 %v967
        %v1136 = vpop.f32.mrf.mxu0
        %v1137 = vadd.f32 %v695, %v1136
        %v1138 = vpop.f32.mrf.mxu0
        %1139 = vmatprep.mubr.f32.mxu0 0.0
        %1140 = vmatmul.mubr.f32.gmra.mxu0 %v970
        %v1141 = vpop.f32.mrf.mxu0
        %v1142 = vadd.f32 %v695, %v1141
        %v1143 = vpop.f32.mrf.mxu0
        %1144 = vmatprep.mubr.f32.mxu0 0.0
        %1145 = vmatmul.mubr.f32.gmra.mxu0 %v973
        %v1146 = vpop.f32.mrf.mxu0
        %v1147 = vadd.f32 %v695, %v1146
        %v1148 = vpop.f32.mrf.mxu0
        %1149 = vmatprep.mubr.f32.mxu0 0.0
        %1150 = vmatmul.mubr.f32.gmra.mxu0 %v976
        %v1151 = vpop.f32.mrf.mxu0
        %v1152 = vadd.f32 %v695, %v1151
        %v1153 = vpop.f32.mrf.mxu0
        %1154 = vmatprep.mubr.f32.mxu0 0.0
        %1155 = vmatmul.mubr.f32.gmra.mxu0 %v979
        %v1156 = vpop.f32.mrf.mxu0
        %v1157 = vadd.f32 %v695, %v1156
        %v1158 = vpop.f32.mrf.mxu0
        %1159 = vmatprep.mubr.f32.mxu0 0.0
        %1160 = vmatmul.mubr.f32.gmra.mxu0 %v982
        %v1161 = vpop.f32.mrf.mxu0
        %v1162 = vadd.f32 %v695, %v1161
        %v1163 = vpop.f32.mrf.mxu0
        %1164 = vmatprep.mubr.f32.mxu0 0.0
        %1165 = vmatmul.mubr.f32.gmra.mxu0 %v985
        %v1166 = vpop.f32.mrf.mxu0
        %v1167 = vadd.f32 %v695, %v1166
        %v1168 = vpop.f32.mrf.mxu0
        %1169 = vmatprep.mubr.f32.mxu0 0.0
        %1170 = vmatmul.mubr.f32.gmra.mxu0 %v988
        %v1171 = vpop.f32.mrf.mxu0
        %v1172 = vadd.f32 %v695, %v1171
        %v1173 = vpop.f32.mrf.mxu0
        %1174 = vmatprep.mubr.f32.mxu0 0.0
        %1175 = vmatmul.mubr.f32.gmra.mxu0 %v991
        %v1176 = vpop.f32.mrf.mxu0
        %v1177 = vadd.f32 %v695, %v1176
        %v1178 = vpop.f32.mrf.mxu0
        %1179 = vmatprep.mubr.f32.mxu0 0.0
        %1180 = vmatmul.mubr.f32.gmra.mxu0 %v994
        %v1181 = vpop.f32.mrf.mxu0
        %v1182 = vadd.f32 %v695, %v1181
        %v1183 = vpop.f32.mrf.mxu0
        %1184 = vmatprep.mubr.f32.mxu0 0.0
        %1185 = vmatmul.mubr.f32.gmra.mxu0 %v997
        %v1186 = vpop.f32.mrf.mxu0
        %v1187 = vadd.f32 %v695, %v1186
        %v1188 = vpop.f32.mrf.mxu0
        %1189 = vmatprep.mubr.f32.mxu0 0.0
        %1190 = vmatmul.mubr.f32.gmra.mxu0 %v1000
        %v1191 = vpop.f32.mrf.mxu0
        %v1192 = vadd.f32 %v695, %v1191
        %v1193 = vpop.f32.mrf.mxu0
        %1194 = vmatprep.mubr.f32.mxu0 0.0
        %1195 = vmatmul.mubr.f32.gmra.mxu0 %v1003
        %v1196 = vpop.f32.mrf.mxu0
        %v1197 = vadd.f32 %v695, %v1196
        %v1198 = vpop.f32.mrf.mxu0
        %1199 = vmatprep.mubr.f32.mxu0 0.0
        %1200 = vmatmul.mubr.f32.gmra.mxu0 %v1006
        %v1201 = vpop.f32.mrf.mxu0
        %v1202 = vadd.f32 %v695, %v1201
        %v1203 = vpop.f32.mrf.mxu0
        %1204 = vmatprep.mubr.f32.mxu0 0.0
        %1205 = vmatmul.mubr.f32.gmra.mxu0 %v1009
        %v1206 = vpop.f32.mrf.mxu0
        %v1207 = vadd.f32 %v695, %v1206
        %v1208 = vpop.f32.mrf.mxu0
        %1209 = vmatprep.mubr.f32.mxu0 0.0
        %1210 = vmatmul.mubr.f32.gmra.mxu0 %v1012
        %v1211 = vpop.f32.mrf.mxu0
        %v1212 = vadd.f32 %v695, %v1211
        %v1213 = vpop.f32.mrf.mxu0
        %1214 = vmatprep.mubr.f32.mxu0 0.0
        %1215 = vmatmul.mubr.f32.gmra.mxu0 %v1015
        %v1216 = vpop.f32.mrf.mxu0
        %v1217 = vadd.f32 %v695, %v1216
        %v1218 = vpop.f32.mrf.mxu0
        %1219 = vmatprep.mubr.f32.mxu0 0.0
        %1220 = vmatmul.mubr.f32.gmra.mxu0 %v1018
        %v1221 = vpop.f32.mrf.mxu0
        %v1222 = vadd.f32 %v695, %v1221
        %v1223 = vpop.f32.mrf.mxu0
        %1224 = vmatprep.mubr.f32.mxu0 0.0
        %1225 = vmatmul.mubr.f32.gmra.mxu0 %v1021
        %v1226 = vpop.f32.mrf.mxu0
        %v1227 = vadd.f32 %v695, %v1226
        %v1228 = vpop.f32.mrf.mxu0
        %1229 = vmatprep.mubr.f32.mxu0 0.0
        %1230 = vmatmul.mubr.f32.gmra.mxu0 %v1024
        %v1231 = vpop.f32.mrf.mxu0
        %v1232 = vadd.f32 %v695, %v1231
        %v1233 = vpop.f32.mrf.mxu0
        %1234 = vmatprep.mubr.f32.mxu0 0.0
        %1235 = vmatmul.mubr.f32.gmra.mxu0 %v1027
        %v1236 = vpop.f32.mrf.mxu0
        %v1237 = vadd.f32 %v695, %v1236
        %v1238 = vpop.f32.mrf.mxu0
        %1239 = vmatprep.mubr.f32.mxu0 0.0
        %1240 = vmatmul.mubr.f32.gmra.mxu0 %v1030
        %v1241 = vpop.f32.mrf.mxu0
        %v1242 = vadd.f32 %v695, %v1241
        %v1243 = vpop.f32.mrf.mxu0
        %1244 = vmatprep.mubr.f32.mxu0 0.0
        %1245 = vmatmul.mubr.f32.gmra.mxu0 %v1033
        %v1246 = vpop.f32.mrf.mxu0
        %v1247 = vadd.f32 %v695, %v1246
        %v1248 = vpop.f32.mrf.mxu0
        %1249 = vmatprep.mubr.f32.mxu0 0.0
        %1250 = vmatmul.mubr.f32.gmra.mxu0 %v1036
        %v1251 = vpop.f32.mrf.mxu0
        %v1252 = vadd.f32 %v695, %v1251
        %v1253 = vpop.f32.mrf.mxu0
        %1254 = vmatprep.mubr.f32.mxu0 0.0
        %1255 = vmatmul.mubr.f32.gmra.mxu0 %v1039
        %v1256 = vpop.f32.mrf.mxu0
        %v1257 = vadd.f32 %v695, %v1256
        %v1258 = vpop.f32.mrf.mxu0
        %1259 = vmatprep.mubr.f32.mxu0 0.0
        %1260 = vmatmul.mubr.f32.gmra.mxu0 %v1042
        %v1261 = vpop.f32.mrf.mxu0
        %v1262 = vadd.f32 %v695, %v1261
        %v1263 = vpop.f32.mrf.mxu0
        %1264 = vmatprep.mubr.f32.mxu0 0.0
        %1265 = vmatmul.mubr.f32.gmra.mxu0 %v1045
        %v1266 = vpop.f32.mrf.mxu0
        %v1267 = vadd.f32 %v695, %v1266
        %v1268 = vpop.f32.mrf.mxu0
        %1269 = vmatprep.mubr.f32.mxu0 0.0
        %1270 = vmatmul.mubr.f32.gmra.mxu0 %v1048
        %v1271 = vpop.f32.mrf.mxu0
        %v1272 = vadd.f32 %v695, %v1271
        %v1273 = vpop.f32.mrf.mxu0
        %1274 = vdwg.mxu0
        %v1275 = vmul.f32 %v1117, %v1117
        %v1276 = vmul.f32 %v1122, %v1122
        %v1277 = vmul.f32 %v1127, %v1127
        %v1278 = vmul.f32 %v1132, %v1132
        %v1279 = vmul.f32 %v1137, %v1137
        %v1280 = vmul.f32 %v1142, %v1142
        %v1281 = vmul.f32 %v1147, %v1147
        %v1282 = vmul.f32 %v1152, %v1152
        %v1283 = vmul.f32 %v1157, %v1157
        %v1284 = vmul.f32 %v1162, %v1162
        %v1285 = vmul.f32 %v1167, %v1167
        %v1286 = vmul.f32 %v1172, %v1172
        %v1287 = vmul.f32 %v1177, %v1177
        %v1288 = vmul.f32 %v1182, %v1182
        %v1289 = vmul.f32 %v1187, %v1187
        %v1290 = vmul.f32 %v1192, %v1192
        %v1291 = vmul.f32 %v1197, %v1197
        %v1292 = vmul.f32 %v1202, %v1202
        %v1293 = vmul.f32 %v1207, %v1207
        %v1294 = vmul.f32 %v1212, %v1212
        %v1295 = vmul.f32 %v1217, %v1217
        %v1296 = vmul.f32 %v1222, %v1222
        %v1297 = vmul.f32 %v1227, %v1227
        %v1298 = vmul.f32 %v1232, %v1232
        %v1299 = vmul.f32 %v1237, %v1237
        %v1300 = vmul.f32 %v1242, %v1242
        %v1301 = vmul.f32 %v1247, %v1247
        %v1302 = vmul.f32 %v1252, %v1252
        %v1303 = vmul.f32 %v1257, %v1257
        %v1304 = vmul.f32 %v1262, %v1262
        %v1305 = vmul.f32 %v1267, %v1267
        %v1306 = vmul.f32 %v1272, %v1272
        %v1307 = vsel %vm567, %v1275, 0.0
        %1308 = vadd.xlane.f32.xlu0 %v1307
        %v1309 = vpop.xlane.xlu0 %1308
        %v1310 = vsel %vm567, %v1276, 0.0
        %1311 = vadd.xlane.f32.xlu0 %v1310
        %v1312 = vpop.xlane.xlu0 %1311
        %v1313 = vsel %vm567, %v1277, 0.0
        %1314 = vadd.xlane.f32.xlu0 %v1313
        %v1315 = vpop.xlane.xlu0 %1314
        %v1316 = vsel %vm567, %v1278, 0.0
        %1317 = vadd.xlane.f32.xlu0 %v1316
        %v1318 = vpop.xlane.xlu0 %1317
        %v1319 = vsel %vm567, %v1279, 0.0
        %1320 = vadd.xlane.f32.xlu0 %v1319
        %v1321 = vpop.xlane.xlu0 %1320
        %v1322 = vsel %vm567, %v1280, 0.0
        %1323 = vadd.xlane.f32.xlu0 %v1322
        %v1324 = vpop.xlane.xlu0 %1323
        %v1325 = vsel %vm567, %v1281, 0.0
        %1326 = vadd.xlane.f32.xlu0 %v1325
        %v1327 = vpop.xlane.xlu0 %1326
        %v1328 = vsel %vm567, %v1282, 0.0
        %1329 = vadd.xlane.f32.xlu0 %v1328
        %v1330 = vpop.xlane.xlu0 %1329
        %v1331 = vsel %vm567, %v1283, 0.0
        %1332 = vadd.xlane.f32.xlu0 %v1331
        %v1333 = vpop.xlane.xlu0 %1332
        %v1334 = vsel %vm567, %v1284, 0.0
        %1335 = vadd.xlane.f32.xlu0 %v1334
        %v1336 = vpop.xlane.xlu0 %1335
        %v1337 = vsel %vm567, %v1285, 0.0
        %1338 = vadd.xlane.f32.xlu0 %v1337
        %v1339 = vpop.xlane.xlu0 %1338
        %v1340 = vsel %vm567, %v1286, 0.0
        %1341 = vadd.xlane.f32.xlu0 %v1340
        %v1342 = vpop.xlane.xlu0 %1341
        %v1343 = vsel %vm567, %v1287, 0.0
        %1344 = vadd.xlane.f32.xlu0 %v1343
        %v1345 = vpop.xlane.xlu0 %1344
        %v1346 = vsel %vm567, %v1288, 0.0
        %1347 = vadd.xlane.f32.xlu0 %v1346
        %v1348 = vpop.xlane.xlu0 %1347
        %v1349 = vsel %vm567, %v1289, 0.0
        %1350 = vadd.xlane.f32.xlu0 %v1349
        %v1351 = vpop.xlane.xlu0 %1350
        %v1352 = vsel %vm567, %v1290, 0.0
        %1353 = vadd.xlane.f32.xlu0 %v1352
        %v1354 = vpop.xlane.xlu0 %1353
        %v1355 = vsel %vm567, %v1291, 0.0
        %1356 = vadd.xlane.f32.xlu0 %v1355
        %v1357 = vpop.xlane.xlu0 %1356
        %v1358 = vsel %vm567, %v1292, 0.0
        %1359 = vadd.xlane.f32.xlu0 %v1358
        %v1360 = vpop.xlane.xlu0 %1359
        %v1361 = vsel %vm567, %v1293, 0.0
        %1362 = vadd.xlane.f32.xlu0 %v1361
        %v1363 = vpop.xlane.xlu0 %1362
        %v1364 = vsel %vm567, %v1294, 0.0
        %1365 = vadd.xlane.f32.xlu0 %v1364
        %v1366 = vpop.xlane.xlu0 %1365
        %v1367 = vsel %vm567, %v1295, 0.0
        %1368 = vadd.xlane.f32.xlu0 %v1367
        %v1369 = vpop.xlane.xlu0 %1368
        %v1370 = vsel %vm567, %v1296, 0.0
        %1371 = vadd.xlane.f32.xlu0 %v1370
        %v1372 = vpop.xlane.xlu0 %1371
        %v1373 = vsel %vm567, %v1297, 0.0
        %1374 = vadd.xlane.f32.xlu0 %v1373
        %v1375 = vpop.xlane.xlu0 %1374
        %v1376 = vsel %vm567, %v1298, 0.0
        %1377 = vadd.xlane.f32.xlu0 %v1376
        %v1378 = vpop.xlane.xlu0 %1377
        %v1379 = vsel %vm567, %v1299, 0.0
        %1380 = vadd.xlane.f32.xlu0 %v1379
        %v1381 = vpop.xlane.xlu0 %1380
        %v1382 = vsel %vm567, %v1300, 0.0
        %1383 = vadd.xlane.f32.xlu0 %v1382
        %v1384 = vpop.xlane.xlu0 %1383
        %v1385 = vsel %vm567, %v1301, 0.0
        %1386 = vadd.xlane.f32.xlu0 %v1385
        %v1387 = vpop.xlane.xlu0 %1386
        %v1388 = vsel %vm567, %v1302, 0.0
        %1389 = vadd.xlane.f32.xlu0 %v1388
        %v1390 = vpop.xlane.xlu0 %1389
        %v1391 = vsel %vm567, %v1303, 0.0
        %1392 = vadd.xlane.f32.xlu0 %v1391
        %v1393 = vpop.xlane.xlu0 %1392
        %v1394 = vsel %vm567, %v1304, 0.0
        %1395 = vadd.xlane.f32.xlu0 %v1394
        %v1396 = vpop.xlane.xlu0 %1395
        %v1397 = vsel %vm567, %v1305, 0.0
        %1398 = vadd.xlane.f32.xlu0 %v1397
        %v1399 = vpop.xlane.xlu0 %1398
        %v1400 = vsel %vm567, %v1306, 0.0
        %1401 = vadd.xlane.f32.xlu0 %v1400
        %v1402 = vpop.xlane.xlu0 %1401
        %v1403 = vadd.f32 %v1309, %v1312
        %v1404 = vadd.f32 %v1403, %v1315
        %v1405 = vadd.f32 %v1404, %v1318
        %v1406 = vrot.slane %v1405, 4
        %v1407 = vadd.f32 %v1405, %v1406
        %v1408 = vrot.slane %v1407, 2
        %v1409 = vadd.f32 %v1407, %v1408
        %v1410 = vrot.slane %v1409, 1
        %v1411 = vadd.f32 %v1409, %v1410
        %v1412 = vadd.f32 %v1321, %v1324
        %v1413 = vadd.f32 %v1412, %v1327
        %v1414 = vadd.f32 %v1413, %v1330
        %v1415 = vrot.slane %v1414, 4
        %v1416 = vadd.f32 %v1414, %v1415
        %v1417 = vrot.slane %v1416, 2
        %v1418 = vadd.f32 %v1416, %v1417
        %v1419 = vrot.slane %v1418, 1
        %v1420 = vadd.f32 %v1418, %v1419
        %v1421 = vadd.f32 %v1333, %v1336
        %v1422 = vadd.f32 %v1421, %v1339
        %v1423 = vadd.f32 %v1422, %v1342
        %v1424 = vrot.slane %v1423, 4
        %v1425 = vadd.f32 %v1423, %v1424
        %v1426 = vrot.slane %v1425, 2
        %v1427 = vadd.f32 %v1425, %v1426
        %v1428 = vrot.slane %v1427, 1
        %v1429 = vadd.f32 %v1427, %v1428
        %v1430 = vadd.f32 %v1345, %v1348
        %v1431 = vadd.f32 %v1430, %v1351
        %v1432 = vadd.f32 %v1431, %v1354
        %v1433 = vrot.slane %v1432, 4
        %v1434 = vadd.f32 %v1432, %v1433
        %v1435 = vrot.slane %v1434, 2
        %v1436 = vadd.f32 %v1434, %v1435
        %v1437 = vrot.slane %v1436, 1
        %v1438 = vadd.f32 %v1436, %v1437
        %v1439 = vadd.f32 %v1357, %v1360
        %v1440 = vadd.f32 %v1439, %v1363
        %v1441 = vadd.f32 %v1440, %v1366
        %v1442 = vrot.slane %v1441, 4
        %v1443 = vadd.f32 %v1441, %v1442
        %v1444 = vrot.slane %v1443, 2
        %v1445 = vadd.f32 %v1443, %v1444
        %v1446 = vrot.slane %v1445, 1
        %v1447 = vadd.f32 %v1445, %v1446
        %v1448 = vadd.f32 %v1369, %v1372
        %v1449 = vadd.f32 %v1448, %v1375
        %v1450 = vadd.f32 %v1449, %v1378
        %v1451 = vrot.slane %v1450, 4
        %v1452 = vadd.f32 %v1450, %v1451
        %v1453 = vrot.slane %v1452, 2
        %v1454 = vadd.f32 %v1452, %v1453
        %v1455 = vrot.slane %v1454, 1
        %v1456 = vadd.f32 %v1454, %v1455
        %v1457 = vadd.f32 %v1381, %v1384
        %v1458 = vadd.f32 %v1457, %v1387
        %v1459 = vadd.f32 %v1458, %v1390
        %v1460 = vrot.slane %v1459, 4
        %v1461 = vadd.f32 %v1459, %v1460
        %v1462 = vrot.slane %v1461, 2
        %v1463 = vadd.f32 %v1461, %v1462
        %v1464 = vrot.slane %v1463, 1
        %v1465 = vadd.f32 %v1463, %v1464
        %v1466 = vadd.f32 %v1393, %v1396
        %v1467 = vadd.f32 %v1466, %v1399
        %v1468 = vadd.f32 %v1467, %v1402
        %v1469 = vrot.slane %v1468, 4
        %v1470 = vadd.f32 %v1468, %v1469
        %v1471 = vrot.slane %v1470, 2
        %v1472 = vadd.f32 %v1470, %v1471
        %v1473 = vrot.slane %v1472, 1
        %v1474 = vadd.f32 %v1472, %v1473
        %v1475 = vmax.f32 %v1411, 1e-24
        %v1476 = vmax.f32 %v1420, 1e-24
        %v1477 = vmax.f32 %v1429, 1e-24
        %v1478 = vmax.f32 %v1438, 1e-24
        %v1479 = vmax.f32 %v1447, 1e-24
        %v1480 = vmax.f32 %v1456, 1e-24
        %v1481 = vmax.f32 %v1465, 1e-24
        %v1482 = vmax.f32 %v1474, 1e-24
        %v1483 = vrsqrt.pop %v1475
        %v1484 = vrsqrt.pop %v1476
        %v1485 = vrsqrt.pop %v1477
        %v1486 = vrsqrt.pop %v1478
        %v1487 = vrsqrt.pop %v1479
        %v1488 = vrsqrt.pop %v1480
        %v1489 = vrsqrt.pop %v1481
        %v1490 = vrsqrt.pop %v1482
        %v1491 = vmul.f32 %v1117, %v1483
        %v1492 = vmul.f32 %v1122, %v1483
        %v1493 = vmul.f32 %v1127, %v1483
        %v1494 = vmul.f32 %v1132, %v1483
        %v1495 = vmul.f32 %v1137, %v1484
        %v1496 = vmul.f32 %v1142, %v1484
        %v1497 = vmul.f32 %v1147, %v1484
        %v1498 = vmul.f32 %v1152, %v1484
        %v1499 = vmul.f32 %v1157, %v1485
        %v1500 = vmul.f32 %v1162, %v1485
        %v1501 = vmul.f32 %v1167, %v1485
        %v1502 = vmul.f32 %v1172, %v1485
        %v1503 = vmul.f32 %v1177, %v1486
        %v1504 = vmul.f32 %v1182, %v1486
        %v1505 = vmul.f32 %v1187, %v1486
        %v1506 = vmul.f32 %v1192, %v1486
        %v1507 = vmul.f32 %v1197, %v1487
        %v1508 = vmul.f32 %v1202, %v1487
        %v1509 = vmul.f32 %v1207, %v1487
        %v1510 = vmul.f32 %v1212, %v1487
        %v1511 = vmul.f32 %v1217, %v1488
        %v1512 = vmul.f32 %v1222, %v1488
        %v1513 = vmul.f32 %v1227, %v1488
        %v1514 = vmul.f32 %v1232, %v1488
        %v1515 = vmul.f32 %v1237, %v1489
        %v1516 = vmul.f32 %v1242, %v1489
        %v1517 = vmul.f32 %v1247, %v1489
        %v1518 = vmul.f32 %v1252, %v1489
        %v1519 = vmul.f32 %v1257, %v1490
        %v1520 = vmul.f32 %v1262, %v1490
        %v1521 = vmul.f32 %v1267, %v1490
        %v1522 = vmul.f32 %v1272, %v1490
        %v1523 = vcombine.low %v1491, %v1499
        %v1524 = vcombine.high %v1491, %v1499
        %v1526 = vunpack.c.l.s4 1983009808
        %v1527 = vunpack.c.0.s8 %v1526
        %v1528 = vlaneseq
        %v1529 = vshrl.u32 %v1528, 7
        %v1530 = vsub.s32 %v1527, %v1529
        %v1531 = vrot.slane %v1523, %v1530
        %v1533 = vunpack.c.l.s4 1983009808
        %v1534 = vunpack.c.0.s8 %v1533
        %v1535 = vlaneseq
        %v1536 = vshrl.u32 %v1535, 7
        %v1537 = vsub.s32 %v1534, %v1536
        %v1538 = vrot.slane %v1524, %v1537
        %v1539 = vcombine.low %v1495, %v1503
        %v1540 = vcombine.high %v1495, %v1503
        %v1542 = vunpack.c.l.s4 1983009808
        %v1543 = vunpack.c.0.s8 %v1542
        %v1544 = vlaneseq
        %v1545 = vshrl.u32 %v1544, 7
        %v1546 = vsub.s32 %v1543, %v1545
        %v1547 = vrot.slane %v1539, %v1546
        %v1549 = vunpack.c.l.s4 1983009808
        %v1550 = vunpack.c.0.s8 %v1549
        %v1551 = vlaneseq
        %v1552 = vshrl.u32 %v1551, 7
        %v1553 = vsub.s32 %v1550, %v1552
        %v1554 = vrot.slane %v1540, %v1553
        %v1555 = vcombine.low %v1507, %v1515
        %v1556 = vcombine.high %v1507, %v1515
        %v1558 = vunpack.c.l.s4 1983009808
        %v1559 = vunpack.c.0.s8 %v1558
        %v1560 = vlaneseq
        %v1561 = vshrl.u32 %v1560, 7
        %v1562 = vsub.s32 %v1559, %v1561
        %v1563 = vrot.slane %v1555, %v1562
        %v1565 = vunpack.c.l.s4 1983009808
        %v1566 = vunpack.c.0.s8 %v1565
        %v1567 = vlaneseq
        %v1568 = vshrl.u32 %v1567, 7
        %v1569 = vsub.s32 %v1566, %v1568
        %v1570 = vrot.slane %v1556, %v1569
        %v1571 = vcombine.low %v1511, %v1519
        %v1572 = vcombine.high %v1511, %v1519
        %v1574 = vunpack.c.l.s4 1983009808
        %v1575 = vunpack.c.0.s8 %v1574
        %v1576 = vlaneseq
        %v1577 = vshrl.u32 %v1576, 7
        %v1578 = vsub.s32 %v1575, %v1577
        %v1579 = vrot.slane %v1571, %v1578
        %v1581 = vunpack.c.l.s4 1983009808
        %v1582 = vunpack.c.0.s8 %v1581
        %v1583 = vlaneseq
        %v1584 = vshrl.u32 %v1583, 7
        %v1585 = vsub.s32 %v1582, %v1584
        %v1586 = vrot.slane %v1572, %v1585
        %v1587 = vcombine.low %v1531, %v1547
        %v1588 = vcombine.high %v1531, %v1547
        %v1590 = vunpack.c.l.s4 1934713408
        %v1591 = vunpack.c.0.s8 %v1590
        %v1592 = vlaneseq
        %v1593 = vshrl.u32 %v1592, 7
        %v1594 = vsub.s32 %v1591, %v1593
        %v1595 = vrot.slane %v1587, %v1594
        %v1597 = vunpack.c.l.s4 1934713408
        %v1598 = vunpack.c.0.s8 %v1597
        %v1599 = vlaneseq
        %v1600 = vshrl.u32 %v1599, 7
        %v1601 = vsub.s32 %v1598, %v1600
        %v1602 = vrot.slane %v1588, %v1601
        %v1603 = vcombine.low %v1538, %v1554
        %v1604 = vcombine.high %v1538, %v1554
        %v1606 = vunpack.c.l.s4 1934713408
        %v1607 = vunpack.c.0.s8 %v1606
        %v1608 = vlaneseq
        %v1609 = vshrl.u32 %v1608, 7
        %v1610 = vsub.s32 %v1607, %v1609
        %v1611 = vrot.slane %v1603, %v1610
        %v1613 = vunpack.c.l.s4 1934713408
        %v1614 = vunpack.c.0.s8 %v1613
        %v1615 = vlaneseq
        %v1616 = vshrl.u32 %v1615, 7
        %v1617 = vsub.s32 %v1614, %v1616
        %v1618 = vrot.slane %v1604, %v1617
        %v1619 = vcombine.low %v1563, %v1579
        %v1620 = vcombine.high %v1563, %v1579
        %v1622 = vunpack.c.l.s4 1934713408
        %v1623 = vunpack.c.0.s8 %v1622
        %v1624 = vlaneseq
        %v1625 = vshrl.u32 %v1624, 7
        %v1626 = vsub.s32 %v1623, %v1625
        %v1627 = vrot.slane %v1619, %v1626
        %v1629 = vunpack.c.l.s4 1934713408
        %v1630 = vunpack.c.0.s8 %v1629
        %v1631 = vlaneseq
        %v1632 = vshrl.u32 %v1631, 7
        %v1633 = vsub.s32 %v1630, %v1632
        %v1634 = vrot.slane %v1620, %v1633
        %v1635 = vcombine.low %v1570, %v1586
        %v1636 = vcombine.high %v1570, %v1586
        %v1638 = vunpack.c.l.s4 1934713408
        %v1639 = vunpack.c.0.s8 %v1638
        %v1640 = vlaneseq
        %v1641 = vshrl.u32 %v1640, 7
        %v1642 = vsub.s32 %v1639, %v1641
        %v1643 = vrot.slane %v1635, %v1642
        %v1645 = vunpack.c.l.s4 1934713408
        %v1646 = vunpack.c.0.s8 %v1645
        %v1647 = vlaneseq
        %v1648 = vshrl.u32 %v1647, 7
        %v1649 = vsub.s32 %v1646, %v1648
        %v1650 = vrot.slane %v1636, %v1649
        %v1651 = vcombine.low %v1595, %v1627
        %v1652 = vcombine.high %v1595, %v1627
        %v1653 = vcombine.low %v1602, %v1634
        %v1654 = vcombine.high %v1602, %v1634
        %v1655 = vcombine.low %v1611, %v1643
        %v1656 = vcombine.high %v1611, %v1643
        %v1657 = vcombine.low %v1618, %v1650
        %v1658 = vcombine.high %v1618, %v1650
        %v1659 = vcombine.low %v1492, %v1500
        %v1660 = vcombine.high %v1492, %v1500
        %v1662 = vunpack.c.l.s4 1983009808
        %v1663 = vunpack.c.0.s8 %v1662
        %v1664 = vlaneseq
        %v1665 = vshrl.u32 %v1664, 7
        %v1666 = vsub.s32 %v1663, %v1665
        %v1667 = vrot.slane %v1659, %v1666
        %v1669 = vunpack.c.l.s4 1983009808
        %v1670 = vunpack.c.0.s8 %v1669
        %v1671 = vlaneseq
        %v1672 = vshrl.u32 %v1671, 7
        %v1673 = vsub.s32 %v1670, %v1672
        %v1674 = vrot.slane %v1660, %v1673
        %v1675 = vcombine.low %v1496, %v1504
        %v1676 = vcombine.high %v1496, %v1504
        %v1678 = vunpack.c.l.s4 1983009808
        %v1679 = vunpack.c.0.s8 %v1678
        %v1680 = vlaneseq
        %v1681 = vshrl.u32 %v1680, 7
        %v1682 = vsub.s32 %v1679, %v1681
        %v1683 = vrot.slane %v1675, %v1682
        %v1685 = vunpack.c.l.s4 1983009808
        %v1686 = vunpack.c.0.s8 %v1685
        %v1687 = vlaneseq
        %v1688 = vshrl.u32 %v1687, 7
        %v1689 = vsub.s32 %v1686, %v1688
        %v1690 = vrot.slane %v1676, %v1689
        %v1691 = vcombine.low %v1508, %v1516
        %v1692 = vcombine.high %v1508, %v1516
        %v1694 = vunpack.c.l.s4 1983009808
        %v1695 = vunpack.c.0.s8 %v1694
        %v1696 = vlaneseq
        %v1697 = vshrl.u32 %v1696, 7
        %v1698 = vsub.s32 %v1695, %v1697
        %v1699 = vrot.slane %v1691, %v1698
        %v1701 = vunpack.c.l.s4 1983009808
        %v1702 = vunpack.c.0.s8 %v1701
        %v1703 = vlaneseq
        %v1704 = vshrl.u32 %v1703, 7
        %v1705 = vsub.s32 %v1702, %v1704
        %v1706 = vrot.slane %v1692, %v1705
        %v1707 = vcombine.low %v1512, %v1520
        %v1708 = vcombine.high %v1512, %v1520
        %v1710 = vunpack.c.l.s4 1983009808
        %v1711 = vunpack.c.0.s8 %v1710
        %v1712 = vlaneseq
        %v1713 = vshrl.u32 %v1712, 7
        %v1714 = vsub.s32 %v1711, %v1713
        %v1715 = vrot.slane %v1707, %v1714
        %v1717 = vunpack.c.l.s4 1983009808
        %v1718 = vunpack.c.0.s8 %v1717
        %v1719 = vlaneseq
        %v1720 = vshrl.u32 %v1719, 7
        %v1721 = vsub.s32 %v1718, %v1720
        %v1722 = vrot.slane %v1708, %v1721
        %v1723 = vcombine.low %v1667, %v1683
        %v1724 = vcombine.high %v1667, %v1683
        %v1726 = vunpack.c.l.s4 1934713408
        %v1727 = vunpack.c.0.s8 %v1726
        %v1728 = vlaneseq
        %v1729 = vshrl.u32 %v1728, 7
        %v1730 = vsub.s32 %v1727, %v1729
        %v1731 = vrot.slane %v1723, %v1730
        %v1733 = vunpack.c.l.s4 1934713408
        %v1734 = vunpack.c.0.s8 %v1733
        %v1735 = vlaneseq
        %v1736 = vshrl.u32 %v1735, 7
        %v1737 = vsub.s32 %v1734, %v1736
        %v1738 = vrot.slane %v1724, %v1737
        %v1739 = vcombine.low %v1674, %v1690
        %v1740 = vcombine.high %v1674, %v1690
        %v1742 = vunpack.c.l.s4 1934713408
        %v1743 = vunpack.c.0.s8 %v1742
        %v1744 = vlaneseq
        %v1745 = vshrl.u32 %v1744, 7
        %v1746 = vsub.s32 %v1743, %v1745
        %v1747 = vrot.slane %v1739, %v1746
        %v1749 = vunpack.c.l.s4 1934713408
        %v1750 = vunpack.c.0.s8 %v1749
        %v1751 = vlaneseq
        %v1752 = vshrl.u32 %v1751, 7
        %v1753 = vsub.s32 %v1750, %v1752
        %v1754 = vrot.slane %v1740, %v1753
        %v1755 = vcombine.low %v1699, %v1715
        %v1756 = vcombine.high %v1699, %v1715
        %v1758 = vunpack.c.l.s4 1934713408
        %v1759 = vunpack.c.0.s8 %v1758
        %v1760 = vlaneseq
        %v1761 = vshrl.u32 %v1760, 7
        %v1762 = vsub.s32 %v1759, %v1761
        %v1763 = vrot.slane %v1755, %v1762
        %v1765 = vunpack.c.l.s4 1934713408
        %v1766 = vunpack.c.0.s8 %v1765
        %v1767 = vlaneseq
        %v1768 = vshrl.u32 %v1767, 7
        %v1769 = vsub.s32 %v1766, %v1768
        %v1770 = vrot.slane %v1756, %v1769
        %v1771 = vcombine.low %v1706, %v1722
        %v1772 = vcombine.high %v1706, %v1722
        %v1774 = vunpack.c.l.s4 1934713408
        %v1775 = vunpack.c.0.s8 %v1774
        %v1776 = vlaneseq
        %v1777 = vshrl.u32 %v1776, 7
        %v1778 = vsub.s32 %v1775, %v1777
        %v1779 = vrot.slane %v1771, %v1778
        %v1781 = vunpack.c.l.s4 1934713408
        %v1782 = vunpack.c.0.s8 %v1781
        %v1783 = vlaneseq
        %v1784 = vshrl.u32 %v1783, 7
        %v1785 = vsub.s32 %v1782, %v1784
        %v1786 = vrot.slane %v1772, %v1785
        %v1787 = vcombine.low %v1731, %v1763
        %v1788 = vcombine.high %v1731, %v1763
        %v1789 = vcombine.low %v1738, %v1770
        %v1790 = vcombine.high %v1738, %v1770
        %v1791 = vcombine.low %v1747, %v1779
        %v1792 = vcombine.high %v1747, %v1779
        %v1793 = vcombine.low %v1754, %v1786
        %v1794 = vcombine.high %v1754, %v1786
        %v1795 = vcombine.low %v1493, %v1501
        %v1796 = vcombine.high %v1493, %v1501
        %v1798 = vunpack.c.l.s4 1983009808
        %v1799 = vunpack.c.0.s8 %v1798
        %v1800 = vlaneseq
        %v1801 = vshrl.u32 %v1800, 7
        %v1802 = vsub.s32 %v1799, %v1801
        %v1803 = vrot.slane %v1795, %v1802
        %v1805 = vunpack.c.l.s4 1983009808
        %v1806 = vunpack.c.0.s8 %v1805
        %v1807 = vlaneseq
        %v1808 = vshrl.u32 %v1807, 7
        %v1809 = vsub.s32 %v1806, %v1808
        %v1810 = vrot.slane %v1796, %v1809
        %v1811 = vcombine.low %v1497, %v1505
        %v1812 = vcombine.high %v1497, %v1505
        %v1814 = vunpack.c.l.s4 1983009808
        %v1815 = vunpack.c.0.s8 %v1814
        %v1816 = vlaneseq
        %v1817 = vshrl.u32 %v1816, 7
        %v1818 = vsub.s32 %v1815, %v1817
        %v1819 = vrot.slane %v1811, %v1818
        %v1821 = vunpack.c.l.s4 1983009808
        %v1822 = vunpack.c.0.s8 %v1821
        %v1823 = vlaneseq
        %v1824 = vshrl.u32 %v1823, 7
        %v1825 = vsub.s32 %v1822, %v1824
        %v1826 = vrot.slane %v1812, %v1825
        %v1827 = vcombine.low %v1509, %v1517
        %v1828 = vcombine.high %v1509, %v1517
        %v1830 = vunpack.c.l.s4 1983009808
        %v1831 = vunpack.c.0.s8 %v1830
        %v1832 = vlaneseq
        %v1833 = vshrl.u32 %v1832, 7
        %v1834 = vsub.s32 %v1831, %v1833
        %v1835 = vrot.slane %v1827, %v1834
        %v1837 = vunpack.c.l.s4 1983009808
        %v1838 = vunpack.c.0.s8 %v1837
        %v1839 = vlaneseq
        %v1840 = vshrl.u32 %v1839, 7
        %v1841 = vsub.s32 %v1838, %v1840
        %v1842 = vrot.slane %v1828, %v1841
        %v1843 = vcombine.low %v1513, %v1521
        %v1844 = vcombine.high %v1513, %v1521
        %v1846 = vunpack.c.l.s4 1983009808
        %v1847 = vunpack.c.0.s8 %v1846
        %v1848 = vlaneseq
        %v1849 = vshrl.u32 %v1848, 7
        %v1850 = vsub.s32 %v1847, %v1849
        %v1851 = vrot.slane %v1843, %v1850
        %v1853 = vunpack.c.l.s4 1983009808
        %v1854 = vunpack.c.0.s8 %v1853
        %v1855 = vlaneseq
        %v1856 = vshrl.u32 %v1855, 7
        %v1857 = vsub.s32 %v1854, %v1856
        %v1858 = vrot.slane %v1844, %v1857
        %v1859 = vcombine.low %v1803, %v1819
        %v1860 = vcombine.high %v1803, %v1819
        %v1862 = vunpack.c.l.s4 1934713408
        %v1863 = vunpack.c.0.s8 %v1862
        %v1864 = vlaneseq
        %v1865 = vshrl.u32 %v1864, 7
        %v1866 = vsub.s32 %v1863, %v1865
        %v1867 = vrot.slane %v1859, %v1866
        %v1869 = vunpack.c.l.s4 1934713408
        %v1870 = vunpack.c.0.s8 %v1869
        %v1871 = vlaneseq
        %v1872 = vshrl.u32 %v1871, 7
        %v1873 = vsub.s32 %v1870, %v1872
        %v1874 = vrot.slane %v1860, %v1873
        %v1875 = vcombine.low %v1810, %v1826
        %v1876 = vcombine.high %v1810, %v1826
        %v1878 = vunpack.c.l.s4 1934713408
        %v1879 = vunpack.c.0.s8 %v1878
        %v1880 = vlaneseq
        %v1881 = vshrl.u32 %v1880, 7
        %v1882 = vsub.s32 %v1879, %v1881
        %v1883 = vrot.slane %v1875, %v1882
        %v1885 = vunpack.c.l.s4 1934713408
        %v1886 = vunpack.c.0.s8 %v1885
        %v1887 = vlaneseq
        %v1888 = vshrl.u32 %v1887, 7
        %v1889 = vsub.s32 %v1886, %v1888
        %v1890 = vrot.slane %v1876, %v1889
        %v1891 = vcombine.low %v1835, %v1851
        %v1892 = vcombine.high %v1835, %v1851
        %v1894 = vunpack.c.l.s4 1934713408
        %v1895 = vunpack.c.0.s8 %v1894
        %v1896 = vlaneseq
        %v1897 = vshrl.u32 %v1896, 7
        %v1898 = vsub.s32 %v1895, %v1897
        %v1899 = vrot.slane %v1891, %v1898
        %v1901 = vunpack.c.l.s4 1934713408
        %v1902 = vunpack.c.0.s8 %v1901
        %v1903 = vlaneseq
        %v1904 = vshrl.u32 %v1903, 7
        %v1905 = vsub.s32 %v1902, %v1904
        %v1906 = vrot.slane %v1892, %v1905
        %v1907 = vcombine.low %v1842, %v1858
        %v1908 = vcombine.high %v1842, %v1858
        %v1910 = vunpack.c.l.s4 1934713408
        %v1911 = vunpack.c.0.s8 %v1910
        %v1912 = vlaneseq
        %v1913 = vshrl.u32 %v1912, 7
        %v1914 = vsub.s32 %v1911, %v1913
        %v1915 = vrot.slane %v1907, %v1914
        %v1917 = vunpack.c.l.s4 1934713408
        %v1918 = vunpack.c.0.s8 %v1917
        %v1919 = vlaneseq
        %v1920 = vshrl.u32 %v1919, 7
        %v1921 = vsub.s32 %v1918, %v1920
        %v1922 = vrot.slane %v1908, %v1921
        %v1923 = vcombine.low %v1867, %v1899
        %v1924 = vcombine.high %v1867, %v1899
        %v1925 = vcombine.low %v1874, %v1906
        %v1926 = vcombine.high %v1874, %v1906
        %v1927 = vcombine.low %v1883, %v1915
        %v1928 = vcombine.high %v1883, %v1915
        %v1929 = vcombine.low %v1890, %v1922
        %v1930 = vcombine.high %v1890, %v1922
        %v1931 = vcombine.low %v1494, %v1502
        %v1932 = vcombine.high %v1494, %v1502
        %v1934 = vunpack.c.l.s4 1983009808
        %v1935 = vunpack.c.0.s8 %v1934
        %v1936 = vlaneseq
        %v1937 = vshrl.u32 %v1936, 7
        %v1938 = vsub.s32 %v1935, %v1937
        %v1939 = vrot.slane %v1931, %v1938
        %v1941 = vunpack.c.l.s4 1983009808
        %v1942 = vunpack.c.0.s8 %v1941
        %v1943 = vlaneseq
        %v1944 = vshrl.u32 %v1943, 7
        %v1945 = vsub.s32 %v1942, %v1944
        %v1946 = vrot.slane %v1932, %v1945
        %v1947 = vcombine.low %v1498, %v1506
        %v1948 = vcombine.high %v1498, %v1506
        %v1950 = vunpack.c.l.s4 1983009808
        %v1951 = vunpack.c.0.s8 %v1950
        %v1952 = vlaneseq
        %v1953 = vshrl.u32 %v1952, 7
        %v1954 = vsub.s32 %v1951, %v1953
        %v1955 = vrot.slane %v1947, %v1954
        %v1957 = vunpack.c.l.s4 1983009808
        %v1958 = vunpack.c.0.s8 %v1957
        %v1959 = vlaneseq
        %v1960 = vshrl.u32 %v1959, 7
        %v1961 = vsub.s32 %v1958, %v1960
        %v1962 = vrot.slane %v1948, %v1961
        %v1963 = vcombine.low %v1510, %v1518
        %v1964 = vcombine.high %v1510, %v1518
        %v1966 = vunpack.c.l.s4 1983009808
        %v1967 = vunpack.c.0.s8 %v1966
        %v1968 = vlaneseq
        %v1969 = vshrl.u32 %v1968, 7
        %v1970 = vsub.s32 %v1967, %v1969
        %v1971 = vrot.slane %v1963, %v1970
        %v1973 = vunpack.c.l.s4 1983009808
        %v1974 = vunpack.c.0.s8 %v1973
        %v1975 = vlaneseq
        %v1976 = vshrl.u32 %v1975, 7
        %v1977 = vsub.s32 %v1974, %v1976
        %v1978 = vrot.slane %v1964, %v1977
        %v1979 = vcombine.low %v1514, %v1522
        %v1980 = vcombine.high %v1514, %v1522
        %v1982 = vunpack.c.l.s4 1983009808
        %v1983 = vunpack.c.0.s8 %v1982
        %v1984 = vlaneseq
        %v1985 = vshrl.u32 %v1984, 7
        %v1986 = vsub.s32 %v1983, %v1985
        %v1987 = vrot.slane %v1979, %v1986
        %v1989 = vunpack.c.l.s4 1983009808
        %v1990 = vunpack.c.0.s8 %v1989
        %v1991 = vlaneseq
        %v1992 = vshrl.u32 %v1991, 7
        %v1993 = vsub.s32 %v1990, %v1992
        %v1994 = vrot.slane %v1980, %v1993
        %v1995 = vcombine.low %v1939, %v1955
        %v1996 = vcombine.high %v1939, %v1955
        %v1998 = vunpack.c.l.s4 1934713408
        %v1999 = vunpack.c.0.s8 %v1998
        %v2000 = vlaneseq
        %v2001 = vshrl.u32 %v2000, 7
        %v2002 = vsub.s32 %v1999, %v2001
        %v2003 = vrot.slane %v1995, %v2002
        %v2005 = vunpack.c.l.s4 1934713408
        %v2006 = vunpack.c.0.s8 %v2005
        %v2007 = vlaneseq
        %v2008 = vshrl.u32 %v2007, 7
        %v2009 = vsub.s32 %v2006, %v2008
        %v2010 = vrot.slane %v1996, %v2009
        %v2011 = vcombine.low %v1946, %v1962
        %v2012 = vcombine.high %v1946, %v1962
        %v2014 = vunpack.c.l.s4 1934713408
        %v2015 = vunpack.c.0.s8 %v2014
        %v2016 = vlaneseq
        %v2017 = vshrl.u32 %v2016, 7
        %v2018 = vsub.s32 %v2015, %v2017
        %v2019 = vrot.slane %v2011, %v2018
        %v2021 = vunpack.c.l.s4 1934713408
        %v2022 = vunpack.c.0.s8 %v2021
        %v2023 = vlaneseq
        %v2024 = vshrl.u32 %v2023, 7
        %v2025 = vsub.s32 %v2022, %v2024
        %v2026 = vrot.slane %v2012, %v2025
        %v2027 = vcombine.low %v1971, %v1987
        %v2028 = vcombine.high %v1971, %v1987
        %v2030 = vunpack.c.l.s4 1934713408
        %v2031 = vunpack.c.0.s8 %v2030
        %v2032 = vlaneseq
        %v2033 = vshrl.u32 %v2032, 7
        %v2034 = vsub.s32 %v2031, %v2033
        %v2035 = vrot.slane %v2027, %v2034
        %v2037 = vunpack.c.l.s4 1934713408
        %v2038 = vunpack.c.0.s8 %v2037
        %v2039 = vlaneseq
        %v2040 = vshrl.u32 %v2039, 7
        %v2041 = vsub.s32 %v2038, %v2040
        %v2042 = vrot.slane %v2028, %v2041
        %v2043 = vcombine.low %v1978, %v1994
        %v2044 = vcombine.high %v1978, %v1994
        %v2046 = vunpack.c.l.s4 1934713408
        %v2047 = vunpack.c.0.s8 %v2046
        %v2048 = vlaneseq
        %v2049 = vshrl.u32 %v2048, 7
        %v2050 = vsub.s32 %v2047, %v2049
        %v2051 = vrot.slane %v2043, %v2050
        %v2053 = vunpack.c.l.s4 1934713408
        %v2054 = vunpack.c.0.s8 %v2053
        %v2055 = vlaneseq
        %v2056 = vshrl.u32 %v2055, 7
        %v2057 = vsub.s32 %v2054, %v2056
        %v2058 = vrot.slane %v2044, %v2057
        %v2059 = vcombine.low %v2003, %v2035
        %v2060 = vcombine.high %v2003, %v2035
        %v2061 = vcombine.low %v2010, %v2042
        %v2062 = vcombine.high %v2010, %v2042
        %v2063 = vcombine.low %v2019, %v2051
        %v2064 = vcombine.high %v2019, %v2051
        %v2065 = vcombine.low %v2026, %v2058
        %v2066 = vcombine.high %v2026, %v2058
        %2068 = vrot.lane.b32.xlu0 %v1652, 8
        %v2069 = vpop.permute.xlu0 %2068
        %2072 = vrot.lane.b32.xlu0 %v1653, 16
        %v2073 = vpop.permute.xlu0 %2072
        %2076 = vrot.lane.b32.xlu0 %v1654, 24
        %v2077 = vpop.permute.xlu0 %2076
        %2080 = vrot.lane.b32.xlu0 %v1655, 32
        %v2081 = vpop.permute.xlu0 %2080
        %2084 = vrot.lane.b32.xlu0 %v1656, 40
        %v2085 = vpop.permute.xlu0 %2084
        %2088 = vrot.lane.b32.xlu0 %v1657, 48
        %v2089 = vpop.permute.xlu0 %2088
        %2092 = vrot.lane.b32.xlu0 %v1658, 56
        %v2093 = vpop.permute.xlu0 %2092
        %2096 = vrot.lane.b32.xlu0 %v1787, 64
        %v2097 = vpop.permute.xlu0 %2096
        %2100 = vrot.lane.b32.xlu0 %v1788, 72
        %v2101 = vpop.permute.xlu0 %2100
        %2104 = vrot.lane.b32.xlu0 %v1789, 80
        %v2105 = vpop.permute.xlu0 %2104
        %2108 = vrot.lane.b32.xlu0 %v1790, 88
        %v2109 = vpop.permute.xlu0 %2108
        %2112 = vrot.lane.b32.xlu0 %v1791, 96
        %v2113 = vpop.permute.xlu0 %2112
        %2116 = vrot.lane.b32.xlu0 %v1792, 104
        %v2117 = vpop.permute.xlu0 %2116
        %2120 = vrot.lane.b32.xlu0 %v1793, 112
        %v2121 = vpop.permute.xlu0 %2120
        %2124 = vrot.lane.b32.xlu0 %v1794, 120
        %v2125 = vpop.permute.xlu0 %2124
        %2128 = vrot.lane.b32.xlu0 %v1924, 8
        %v2129 = vpop.permute.xlu0 %2128
        %2132 = vrot.lane.b32.xlu0 %v1925, 16
        %v2133 = vpop.permute.xlu0 %2132
        %2136 = vrot.lane.b32.xlu0 %v1926, 24
        %v2137 = vpop.permute.xlu0 %2136
        %2140 = vrot.lane.b32.xlu0 %v1927, 32
        %v2141 = vpop.permute.xlu0 %2140
        %2144 = vrot.lane.b32.xlu0 %v1928, 40
        %v2145 = vpop.permute.xlu0 %2144
        %2148 = vrot.lane.b32.xlu0 %v1929, 48
        %v2149 = vpop.permute.xlu0 %2148
        %2152 = vrot.lane.b32.xlu0 %v1930, 56
        %v2153 = vpop.permute.xlu0 %2152
        %2156 = vrot.lane.b32.xlu0 %v2059, 64
        %v2157 = vpop.permute.xlu0 %2156
        %2160 = vrot.lane.b32.xlu0 %v2060, 72
        %v2161 = vpop.permute.xlu0 %2160
        %2164 = vrot.lane.b32.xlu0 %v2061, 80
        %v2165 = vpop.permute.xlu0 %2164
        %2168 = vrot.lane.b32.xlu0 %v2062, 88
        %v2169 = vpop.permute.xlu0 %2168
        %2172 = vrot.lane.b32.xlu0 %v2063, 96
        %v2173 = vpop.permute.xlu0 %2172
        %2176 = vrot.lane.b32.xlu0 %v2064, 104
        %v2177 = vpop.permute.xlu0 %2176
        %2180 = vrot.lane.b32.xlu0 %v2065, 112
        %v2181 = vpop.permute.xlu0 %2180
        %2184 = vrot.lane.b32.xlu0 %v2066, 120
        %v2185 = vpop.permute.xlu0 %2184
        %v2187 = vsel %vm567, %v1651, %v2069
        %v2188 = vsel %vm953, %v2187, %v2073
        %vm2189 = vcmask 195584
        %v2190 = vsel %vm2189, %v2188, %v2077
        %v2191 = vsel %vm316, %v2190, %v2081
        %vm2192 = vcmask 326656
        %v2193 = vsel %vm2192, %v2191, %v2085
        %vm2194 = vcmask 392192
        %v2195 = vsel %vm2194, %v2193, %v2089
        %vm2196 = vcmask 457728
        %v2197 = vsel %vm2196, %v2195, %v2093
        %vm2198 = vcmask 523264
        %v2199 = vsel %vm2198, %v2197, %v2097
        %vm2200 = vcmask 588800
        %v2201 = vsel %vm2200, %v2199, %v2101
        %vm2202 = vcmask 654336
        %v2203 = vsel %vm2202, %v2201, %v2105
        %vm2204 = vcmask 719872
        %v2205 = vsel %vm2204, %v2203, %v2109
        %vm2206 = vcmask 785408
        %v2207 = vsel %vm2206, %v2205, %v2113
        %vm2208 = vcmask 850944
        %v2209 = vsel %vm2208, %v2207, %v2117
        %vm2210 = vcmask 916480
        %v2211 = vsel %vm2210, %v2209, %v2121
        %vm2212 = vcmask 982016
        %v2213 = vsel %vm2212, %v2211, %v2125
        %v2214 = vsel %vm567, %v1923, %v2129
        %v2215 = vsel %vm953, %v2214, %v2133
        %v2216 = vsel %vm2189, %v2215, %v2137
        %v2217 = vsel %vm316, %v2216, %v2141
        %v2218 = vsel %vm2192, %v2217, %v2145
        %v2219 = vsel %vm2194, %v2218, %v2149
        %v2220 = vsel %vm2196, %v2219, %v2153
        %v2221 = vsel %vm2198, %v2220, %v2157
        %v2222 = vsel %vm2200, %v2221, %v2161
        %v2223 = vsel %vm2202, %v2222, %v2165
        %v2224 = vsel %vm2204, %v2223, %v2169
        %v2225 = vsel %vm2206, %v2224, %v2173
        %v2226 = vsel %vm2208, %v2225, %v2177
        %v2227 = vsel %vm2210, %v2226, %v2181
        %v2228 = vsel %vm2212, %v2227, %v2185
        %2229 = vst [vmem:[%s298] sm:$0xff] %v2213
        %2230 = vst [vmem:[%s298 + $0x8] sm:$0xff] %v2228
        %s2231 = sand.u32 %s185, 1
        %s2232 = scalar_lea.sflag [#allocation5], %s2231
        %s2233 = sand.u32 %s185, 1
        %s2234 = smul.addr %s2233, 16
        %s2235 = scalar_lea.vmem [#allocation6], %s2234
        // Predicated region
        $region53: #{tpu_custom_call.1} parent=47 // pred_check
          %p2236 = pneg %p195
        $region54: #{tpu_custom_call.1} parent=47 // pred_check_branch
          %2238 = sbr.rel (%p2236) target = $region56
        $region55: #{tpu_custom_call.1} parent=47 // pred_region
          %s2240 = ssub.s32 256, 256
          %2241 = vsyncadd %s2232, %s2240
          %s2242 = smul.addr %s25, 2
          %s2243 = smul.addr %s2242, 128
          %s2244 = scalar_lea.hbm %s7, %s2243
          %s2246 = sshll.u32 %s2235, 4
          %s2247 = int_to_ptr.vmem [resolvable:$true] %s2246
          %2249 = dma.vmem_to_hbm [thread:$0]  %s2247, 256, %s2244, %s2232
        $region56: #{tpu_custom_call.1} parent=47 // pred_fallthru
          _
      $region48: #{tpu_custom_call.1} parent=5 // pred_fallthru
        _
      %p2250 = scmp.le.s32.totalorder 2, %s20
      // Predicated region
      $region57: #{tpu_custom_call.1} parent=5 // pred_check
        %p2251 = pneg %p2250
      $region58: #{tpu_custom_call.1} parent=5 // pred_check_branch
        %2253 = sbr.rel (%p2251) target = $region60
      $region59: #{tpu_custom_call.1} parent=5 // pred_region
        %s2254 = ssub.s32 %s20, 2
        // Predicated region
        $region61: #{tpu_custom_call.1} parent=59 // pred_check
          %p2255 = pneg %p201
        $region62: #{tpu_custom_call.1} parent=59 // pred_check_branch
          %2257 = sbr.rel (%p2255) target = $region64
        $region63: #{tpu_custom_call.1} parent=59 // pred_region
          %s2258 = sand.u32 %s186, 1
          %s2259 = scalar_lea.sflag [#allocation5], %s2258
          %s2260 = sand.u32 %s186, 1
          %s2261 = smul.addr %s2260, 16
          %s2262 = scalar_lea.vmem [#allocation6], %s2261
          %2263 = dma.done %s2259, 256
        $region64: #{tpu_custom_call.1} parent=59 // pred_fallthru
          _
      $region60: #{tpu_custom_call.1} parent=5 // pred_fallthru
        _
    $region6: #{tpu_custom_call.1} parent=1 // loop_footer
      %s24 = sadd.s32 1, %s20
    $region7: #{tpu_custom_call.1} parent=1 // loop_footer_branch
      %19 = sbr.rel target = $region3
    $region8: #{tpu_custom_call.1} parent=1 // loop_exit
      _
    %2264 = vsyncpa [#allocation4], 1
    %s2265 = scalar_lea.sflag [#allocation4], 1
    %2266 = vsyncpa %s2265, 1
    %2267 = vsyncpa [#allocation5], 1
    %s2268 = scalar_lea.sflag [#allocation5], 1
    %2269 = vsyncpa %s2268, 1

</llo_original>
